<compile_context>
chip_gen: v6e
topology: v6e:2x2x1
jax: 0.10.0
libtpu: 0.0.40
codegen_flags: <defaults>
</compile_context>

<pallas_src>
import math

import jax
import jax.numpy as jnp
import numpy as np
from jax.experimental import pallas as pl
from jax.experimental.pallas import tpu as pltpu

# ---- config consistent with the module's forward (small but faithful) ----
BATCH = 2
CHANNELS = 4
IMAGE_SIZE = 16
PATCH_SIZE = 8
HIDDEN = 32
NUM_LAYERS = 2
NUM_HEADS = 4
HEAD_DIM = HIDDEN // NUM_HEADS
FF = HIDDEN * 4
SEQ = (IMAGE_SIZE // PATCH_SIZE) ** 2            # 4
TOK = BATCH * SEQ                                # 8 tokens, whole batch in one slab
CPP = CHANNELS * PATCH_SIZE * PATCH_SIZE         # 256
LN_EPS = 1e-5                                    # nn.LayerNorm default
LOG2_SEQ = int(math.log2(SEQ))
assert SEQ == 1 << LOG2_SEQ, "block-diagonal mask uses a shift; SEQ must be a power of 2"

# ---- static row offsets inside the three packed parameter slabs ----
# slab32 (lane width 32): fc_w | pos_b | per-layer {wo, w2, bo, ln1w, ln1b, ln2w, ln2b, b2}
S32_FCW = 0
S32_POS = CPP                                    # 256
S32_LAYER = CPP + TOK                            # 264
S32_WO = 0
S32_W2 = HIDDEN                                  # 32
S32_BO = HIDDEN + FF                             # 160
S32_LN1W = S32_BO + TOK
S32_LN1B = S32_LN1W + TOK
S32_LN2W = S32_LN1B + TOK
S32_LN2B = S32_LN2W + TOK
S32_B2 = S32_LN2B + TOK
S32_PER_LAYER = S32_B2 + TOK                     # 208
# slab96 (lane width 96): per-layer {wqkv, bqkv(tiled)}
S96_WQKV = 0
S96_BQKV = HIDDEN
S96_PER_LAYER = HIDDEN + TOK                     # 40
# slab128 (lane width 128): per-layer {w1, b1(tiled)}
S128_W1 = 0
S128_B1 = HIDDEN
S128_PER_LAYER = HIDDEN + TOK                    # 40


def _layer_norm(x, g, b):
    mu = jnp.mean(x, axis=-1, keepdims=True)
    var = jnp.mean(jnp.square(x - mu), axis=-1, keepdims=True)
    return (x - mu) * jax.lax.rsqrt(var + LN_EPS) * g + b


def vision_encoder_kernel(
    patch_ref,   # (TOK, CPP)
    s32_ref,     # (680, 32)  fc_w | pos_b(+fc_b) | per-layer wo/w2/bias/LN rows (pre-tiled)
    s96_ref,     # (80, 96)   per-layer fused QKV weight (q pre-scaled) + tiled QKV bias
    s128_ref,    # (80, 128)  per-layer FFN w1 + tiled b1
    out_ref,     # (TOK, HIDDEN)
):
    # ---- patch embedding; fc_in bias + positional embedding pre-folded into pos rows ----
    fc_w = s32_ref[S32_FCW:S32_FCW + CPP, :]
    pos_b = s32_ref[S32_POS:S32_POS + TOK, :]
    h = jnp.dot(patch_ref[...], fc_w, preferred_element_type=jnp.float32) + pos_b

    # Block-diagonal additive mask so tokens never attend across batch elements
    # (the whole batch lives in one (TOK, HIDDEN) slab).
    row = jax.lax.broadcasted_iota(jnp.int32, (TOK, TOK), 0)
    col = jax.lax.broadcasted_iota(jnp.int32, (TOK, TOK), 1)
    same = jnp.right_shift(row, LOG2_SEQ) == jnp.right_shift(col, LOG2_SEQ)
    mask_bias = jnp.where(same, 0.0, -1e30).astype(jnp.float32)          # (TOK, TOK)

    for l in range(NUM_LAYERS):        # post-norm nn.TransformerEncoderLayer, dropout = 0
        b32 = S32_LAYER + l * S32_PER_LAYER
        b96 = l * S96_PER_LAYER
        b128 = l * S128_PER_LAYER

        # ---- fused QKV: ONE lane-dense (32 x 96) matmul; 1/sqrt(hd) folded into q part ----
        wqkv = s96_ref[b96 + S96_WQKV:b96 + S96_WQKV + HIDDEN, :]        # (32, 96)
        bqkv = s96_ref[b96 + S96_BQKV:b96 + S96_BQKV + TOK, :]           # (8, 96) pre-tiled
        qkv = jnp.dot(h, wqkv, preferred_element_type=jnp.float32) + bqkv  # (TOK, 96)
        q = qkv[:, 0:HIDDEN]
        k = qkv[:, HIDDEN:2 * HIDDEN]
        v = qkv[:, 2 * HIDDEN:3 * HIDDEN]

        # ---- attention core: per-head 2-D matmuls (NH=4, fully unrolled).
        # Same MXU push count as a batched (NH, TOK, HD) einsum but avoids any
        # 3-D relayouts; all operands stay single-vreg 2-D tiles.
        ctx_parts = []
        for hd_i in range(NUM_HEADS):
            lo = hd_i * HEAD_DIM
            qh = q[:, lo:lo + HEAD_DIM]                                   # (8, 8)
            kh = k[:, lo:lo + HEAD_DIM]
            vh = v[:, lo:lo + HEAD_DIM]
            s = jnp.einsum("qd,kd->qk", qh, kh,
                           preferred_element_type=jnp.float32) + mask_bias
            s = s - jnp.max(s, axis=-1, keepdims=True)
            e = jnp.exp(s)
            a = e / jnp.sum(e, axis=-1, keepdims=True)                    # exact softmax
            ctx_parts.append(jnp.dot(a, vh, preferred_element_type=jnp.float32))
        ctx = jnp.concatenate(ctx_parts, axis=-1)                         # (TOK, HIDDEN)

        # ---- output projection: ONE (32 x 32) matmul ----
        wo = s32_ref[b32 + S32_WO:b32 + S32_WO + HIDDEN, :]
        bo = s32_ref[b32 + S32_BO:b32 + S32_BO + TOK, :]
        attn = jnp.dot(ctx, wo, preferred_element_type=jnp.float32) + bo

        ln1w = s32_ref[b32 + S32_LN1W:b32 + S32_LN1W + TOK, :]
        ln1b = s32_ref[b32 + S32_LN1B:b32 + S32_LN1B + TOK, :]
        h = _layer_norm(h + attn, ln1w, ln1b)

        # ---- feed-forward (ReLU, dim_feedforward = 4*HIDDEN) ----
        w1 = s128_ref[b128 + S128_W1:b128 + S128_W1 + HIDDEN, :]          # (32, 128)
        b1 = s128_ref[b128 + S128_B1:b128 + S128_B1 + TOK, :]             # (8, 128)
        w2 = s32_ref[b32 + S32_W2:b32 + S32_W2 + FF, :]                   # (128, 32)
        b2 = s32_ref[b32 + S32_B2:b32 + S32_B2 + TOK, :]
        ff = jnp.maximum(jnp.dot(h, w1, preferred_element_type=jnp.float32) + b1, 0.0)
        ff = jnp.dot(ff, w2, preferred_element_type=jnp.float32) + b2

        ln2w = s32_ref[b32 + S32_LN2W:b32 + S32_LN2W + TOK, :]
        ln2b = s32_ref[b32 + S32_LN2B:b32 + S32_LN2B + TOK, :]
        h = _layer_norm(h + ff, ln2w, ln2b)

    # (TOK, HIDDEN) = (8, 32) is a single vreg; keeping it as-is avoids an in-kernel
    # cross-lane relayout; the wrapper reshape to (B, SEQ, H) is free (leading dims).
    out_ref[...] = h


def extract_patches(image, patch_size):
    """Matches torch.nn.Unfold(kernel=stride=patch_size) + transpose + reshape."""
    bs, c, h, w = image.shape
    p = patch_size
    x = image.reshape(bs, c, h // p, p, w // p, p)
    x = jnp.transpose(x, (0, 2, 4, 1, 3, 5))            # (bs, ph, pw, c, kh, kw)
    return x.reshape(bs, (h // p) * (w // p), c * p * p)


def vision_encoder(image, packed):
    patches = extract_patches(image, PATCH_SIZE).reshape(TOK, CPP)
    args = (patches, packed["slab32"], packed["slab96"], packed["slab128"])
    out = pl.pallas_call(
        vision_encoder_kernel,
        out_shape=jax.ShapeDtypeStruct((TOK, HIDDEN), jnp.float32),
        # Single invocation (no grid): whole arrays resident in VMEM (<200 KiB total).
        in_specs=[pl.BlockSpec(memory_space=pltpu.MemorySpace.VMEM) for _ in args],
        out_specs=pl.BlockSpec(memory_space=pltpu.MemorySpace.VMEM),
    )(*args)
    return out.reshape(BATCH, SEQ, HIDDEN)


def init_params(key):
    keys = jax.random.split(key, 16)

    def w(k, shape, std=0.02):
        return (std * jax.random.normal(k, shape)).astype(jnp.float32)

    L = NUM_LAYERS
    return {
        "fc_w": w(keys[0], (CPP, HIDDEN)),
        "fc_b": w(keys[1], (1, HIDDEN)),
        "pos":  w(keys[2], (1, SEQ, HIDDEN)),
        "wq": w(keys[3], (L, HIDDEN, HIDDEN)), "bq": w(keys[4], (L, 1, HIDDEN)),
        "wk": w(keys[5], (L, HIDDEN, HIDDEN)), "bk": w(keys[6], (L, 1, HIDDEN)),
        "wv": w(keys[7], (L, HIDDEN, HIDDEN)), "bv": w(keys[8], (L, 1, HIDDEN)),
        "wo": w(keys[9], (L, HIDDEN, HIDDEN)), "bo": w(keys[10], (L, 1, HIDDEN)),
        "ln1_w": jnp.ones((L, 1, HIDDEN), jnp.float32),
        "ln1_b": jnp.zeros((L, 1, HIDDEN), jnp.float32),
        "ln2_w": jnp.ones((L, 1, HIDDEN), jnp.float32),
        "ln2_b": jnp.zeros((L, 1, HIDDEN), jnp.float32),
        "w1": w(keys[11], (L, HIDDEN, FF)), "b1": w(keys[12], (L, 1, FF)),
        "w2": w(keys[13], (L, FF, HIDDEN)), "b2": w(keys[14], (L, 1, HIDDEN)),
    }


def pack_params(p):
    """One-time host-side packing into 3 flat, lane-dense slabs (widths 32/96/128)."""
    scale = 1.0 / math.sqrt(HEAD_DIM)

    def tile8(row):                              # (1, W) -> (TOK, W)
        return jnp.tile(row, (TOK, 1))

    # slab32: fc_w | pos(+fc_b) | per-layer wo, w2, tiled bias/LN rows
    pos_b = jnp.tile(p["pos"][0], (BATCH, 1)) + p["fc_b"]        # (TOK, H)
    parts32 = [p["fc_w"], pos_b]
    for l in range(NUM_LAYERS):
        parts32 += [
            p["wo"][l], p["w2"][l],
            tile8(p["bo"][l]), tile8(p["ln1_w"][l]), tile8(p["ln1_b"][l]),
            tile8(p["ln2_w"][l]), tile8(p["ln2_b"][l]), tile8(p["b2"][l]),
        ]
    slab32 = jnp.concatenate(parts32, axis=0).astype(jnp.float32)     # (680, 32)

    # slab96: per-layer fused QKV weight (q part pre-scaled) + tiled fused QKV bias
    parts96 = []
    for l in range(NUM_LAYERS):
        wqkv = jnp.concatenate([p["wq"][l] * scale, p["wk"][l], p["wv"][l]], axis=1)
        bqkv = jnp.concatenate([p["bq"][l] * scale, p["bk"][l], p["bv"][l]], axis=1)
        parts96 += [wqkv, tile8(bqkv)]
    slab96 = jnp.concatenate(parts96, axis=0).astype(jnp.float32)     # (80, 96)

    # slab128: per-layer FFN w1 + tiled b1
    parts128 = []
    for l in range(NUM_LAYERS):
        parts128 += [p["w1"][l], tile8(p["b1"][l])]
    slab128 = jnp.concatenate(parts128, axis=0).astype(jnp.float32)   # (80, 128)

    return {"slab32": slab32, "slab96": slab96, "slab128": slab128}


def reference(image, params):
    """Pure-JAX reference mirroring the PyTorch forward (post-norm, ReLU, no dropout)."""
    h = extract_patches(image, PATCH_SIZE) @ params["fc_w"] + params["fc_b"][0]
    h = h + params["pos"]
    scale = 1.0 / math.sqrt(HEAD_DIM)
    for l in range(NUM_LAYERS):
        q = h @ params["wq"][l] + params["bq"][l]
        k = h @ params["wk"][l] + params["bk"][l]
        v = h @ params["wv"][l] + params["bv"][l]
        qh = q.reshape(BATCH, SEQ, NUM_HEADS, HEAD_DIM).transpose(0, 2, 1, 3)
        kh = k.reshape(BATCH, SEQ, NUM_HEADS, HEAD_DIM).transpose(0, 2, 1, 3)
        vh = v.reshape(BATCH, SEQ, NUM_HEADS, HEAD_DIM).transpose(0, 2, 1, 3)
        s = (qh * scale) @ kh.transpose(0, 1, 3, 2)
        p = jax.nn.softmax(s, axis=-1)
        o = (p @ vh).transpose(0, 2, 1, 3).reshape(BATCH, SEQ, HIDDEN)
        o = o @ params["wo"][l] + params["bo"][l]

        def ln(x, g, b):
            mu = jnp.mean(x, axis=-1, keepdims=True)
            var = jnp.mean(jnp.square(x - mu), axis=-1, keepdims=True)
            return (x - mu) * jax.lax.rsqrt(var + LN_EPS) * g + b

        h = ln(h + o, params["ln1_w"][l], params["ln1_b"][l])
        f = jax.nn.relu(h @ params["w1"][l] + params["b1"][l])
        f = f @ params["w2"][l] + params["b2"][l]
        h = ln(h + f, params["ln2_w"][l], params["ln2_b"][l])
    return h


if __name__ == "__main__":
    key = jax.random.PRNGKey(0)
    pkey, ikey = jax.random.split(key)
    params = init_params(pkey)
    packed = pack_params(params)        # one-time host-side packing, not per-forward work
    image = jax.random.normal(
        ikey, (BATCH, CHANNELS, IMAGE_SIZE, IMAGE_SIZE), dtype=jnp.float32
    )

    out = vision_encoder(image, packed)
    out = jax.block_until_ready(out)

    ref = reference(image, params)
    np.testing.assert_allclose(np.asarray(out), np.asarray(ref), rtol=1e-3, atol=1e-3)
    print("KERNEL_OK")
</pallas_src>

<mosaic_0001>
module attributes {stable_mosaic.version = 11 : i64} {
  func.func @vision_encoder_kernel(%arg0: memref<8x256xf32, #tpu.memory_space<vmem>>, %arg1: memref<680x32xf32, #tpu.memory_space<vmem>>, %arg2: memref<80x96xf32, #tpu.memory_space<vmem>>, %arg3: memref<80x128xf32, #tpu.memory_space<vmem>>, %arg4: memref<8x32xf32, #tpu.memory_space<vmem>>) attributes {dimension_semantics = [], scalar_prefetch = 0 : i64, scratch_operands = 0 : i64, tpu.core_type = #tpu.core_type<tc>} {
    %c0 = arith.constant 0 : index
    %c0_0 = arith.constant 0 : index
    %0 = vector.load %arg1[%c0, %c0_0] : memref<680x32xf32, #tpu.memory_space<vmem>>, vector<256x32xf32>
    %c256 = arith.constant 256 : index
    %c0_1 = arith.constant 0 : index
    %1 = vector.load %arg1[%c256, %c0_1] : memref<680x32xf32, #tpu.memory_space<vmem>>, vector<8x32xf32>
    %c0_2 = arith.constant 0 : index
    %c0_3 = arith.constant 0 : index
    %2 = vector.load %arg0[%c0_2, %c0_3] : memref<8x256xf32, #tpu.memory_space<vmem>>, vector<8x256xf32>
    %cst = arith.constant dense<0.000000e+00> : vector<8x32xf32>
    %3 = tpu.matmul %2, %0, %cst {dimension_numbers = #tpu.dot_dimension_numbers<[1], [0], [0], [1], [0, 0, 1, 1], [], []>} : vector<8x256xf32>, vector<256x32xf32>, vector<8x32xf32> -> vector<8x32xf32>
    %4 = arith.addf %3, %1 : vector<8x32xf32>
    %5 = tpu.iota {dimensions = array<i32: 0>} : vector<8x8xi32>
    %6 = tpu.iota {dimensions = array<i32: 1>} : vector<8x8xi32>
    %c2_i32 = arith.constant 2 : i32
    %7 = vector.broadcast %c2_i32 : i32 to vector<8x8xi32>
    %8 = arith.shrsi %5, %7 : vector<8x8xi32>
    %c2_i32_4 = arith.constant 2 : i32
    %9 = vector.broadcast %c2_i32_4 : i32 to vector<8x8xi32>
    %10 = arith.shrsi %6, %9 : vector<8x8xi32>
    %11 = arith.cmpi eq, %8, %10 : vector<8x8xi32>
    %cst_5 = arith.constant 0.000000e+00 : f32
    %cst_6 = arith.constant -1.000000e+30 : f32
    %12 = vector.broadcast %cst_5 : f32 to vector<8x8xf32>
    %13 = vector.broadcast %cst_6 : f32 to vector<8x8xf32>
    %14 = arith.select %11, %12, %13 : vector<8x8xi1>, vector<8x8xf32>
    %c0_7 = arith.constant 0 : index
    %c0_8 = arith.constant 0 : index
    %15 = vector.load %arg2[%c0_7, %c0_8] : memref<80x96xf32, #tpu.memory_space<vmem>>, vector<32x96xf32>
    %c32 = arith.constant 32 : index
    %c0_9 = arith.constant 0 : index
    %16 = vector.load %arg2[%c32, %c0_9] : memref<80x96xf32, #tpu.memory_space<vmem>>, vector<8x96xf32>
    %cst_10 = arith.constant dense<0.000000e+00> : vector<8x96xf32>
    %17 = tpu.matmul %4, %15, %cst_10 {dimension_numbers = #tpu.dot_dimension_numbers<[1], [0], [0], [1], [0, 0, 1, 1], [], []>} : vector<8x32xf32>, vector<32x96xf32>, vector<8x96xf32> -> vector<8x96xf32>
    %18 = arith.addf %17, %16 : vector<8x96xf32>
    %19 = vector.extract_strided_slice %18 {offsets = [0, 0], sizes = [8, 32], strides = [1, 1]} : vector<8x96xf32> to vector<8x32xf32>
    %20 = vector.extract_strided_slice %18 {offsets = [0, 32], sizes = [8, 32], strides = [1, 1]} : vector<8x96xf32> to vector<8x32xf32>
    %21 = vector.extract_strided_slice %18 {offsets = [0, 64], sizes = [8, 32], strides = [1, 1]} : vector<8x96xf32> to vector<8x32xf32>
    %22 = vector.extract_strided_slice %19 {offsets = [0, 0], sizes = [8, 8], strides = [1, 1]} : vector<8x32xf32> to vector<8x8xf32>
    %23 = vector.extract_strided_slice %20 {offsets = [0, 0], sizes = [8, 8], strides = [1, 1]} : vector<8x32xf32> to vector<8x8xf32>
    %24 = vector.extract_strided_slice %21 {offsets = [0, 0], sizes = [8, 8], strides = [1, 1]} : vector<8x32xf32> to vector<8x8xf32>
    "tpu.trace_start"() <{level = 10 : i32, message = "qd,kd->qk"}> : () -> ()
    %cst_11 = arith.constant dense<0.000000e+00> : vector<8x8xf32>
    %25 = tpu.matmul %22, %23, %cst_11 {dimension_numbers = #tpu.dot_dimension_numbers<[1], [1], [0], [0], [0, 0, 1, 0], [], []>} : vector<8x8xf32>, vector<8x8xf32>, vector<8x8xf32> -> vector<8x8xf32>
    "tpu.trace_stop"() : () -> ()
    %26 = arith.addf %25, %14 : vector<8x8xf32>
    %cst_12 = arith.constant dense<0xFF800000> : vector<8xf32>
    %27 = vector.multi_reduction <maximumf>, %26, %cst_12 [1] : vector<8x8xf32> to vector<8xf32>
    %28 = vector.shape_cast %27 : vector<8xf32> to vector<8x1xf32>
    %29 = vector.broadcast %28 : vector<8x1xf32> to vector<8x8xf32>
    %30 = arith.subf %26, %29 : vector<8x8xf32>
    %31 = math.exp %30 : vector<8x8xf32>
    %cst_13 = arith.constant dense<0.000000e+00> : vector<8xf32>
    %32 = vector.multi_reduction <add>, %31, %cst_13 [1] : vector<8x8xf32> to vector<8xf32>
    %33 = vector.shape_cast %32 : vector<8xf32> to vector<8x1xf32>
    %34 = vector.broadcast %33 : vector<8x1xf32> to vector<8x8xf32>
    %35 = arith.divf %31, %34 : vector<8x8xf32>
    %cst_14 = arith.constant dense<0.000000e+00> : vector<8x8xf32>
    %36 = tpu.matmul %35, %24, %cst_14 {dimension_numbers = #tpu.dot_dimension_numbers<[1], [0], [0], [1], [0, 0, 1, 1], [], []>} : vector<8x8xf32>, vector<8x8xf32>, vector<8x8xf32> -> vector<8x8xf32>
    %37 = vector.extract_strided_slice %19 {offsets = [0, 8], sizes = [8, 8], strides = [1, 1]} : vector<8x32xf32> to vector<8x8xf32>
    %38 = vector.extract_strided_slice %20 {offsets = [0, 8], sizes = [8, 8], strides = [1, 1]} : vector<8x32xf32> to vector<8x8xf32>
    %39 = vector.extract_strided_slice %21 {offsets = [0, 8], sizes = [8, 8], strides = [1, 1]} : vector<8x32xf32> to vector<8x8xf32>
    "tpu.trace_start"() <{level = 10 : i32, message = "qd,kd->qk"}> : () -> ()
    %cst_15 = arith.constant dense<0.000000e+00> : vector<8x8xf32>
    %40 = tpu.matmul %37, %38, %cst_15 {dimension_numbers = #tpu.dot_dimension_numbers<[1], [1], [0], [0], [0, 0, 1, 0], [], []>} : vector<8x8xf32>, vector<8x8xf32>, vector<8x8xf32> -> vector<8x8xf32>
    "tpu.trace_stop"() : () -> ()
    %41 = arith.addf %40, %14 : vector<8x8xf32>
    %cst_16 = arith.constant dense<0xFF800000> : vector<8xf32>
    %42 = vector.multi_reduction <maximumf>, %41, %cst_16 [1] : vector<8x8xf32> to vector<8xf32>
    %43 = vector.shape_cast %42 : vector<8xf32> to vector<8x1xf32>
    %44 = vector.broadcast %43 : vector<8x1xf32> to vector<8x8xf32>
    %45 = arith.subf %41, %44 : vector<8x8xf32>
    %46 = math.exp %45 : vector<8x8xf32>
    %cst_17 = arith.constant dense<0.000000e+00> : vector<8xf32>
    %47 = vector.multi_reduction <add>, %46, %cst_17 [1] : vector<8x8xf32> to vector<8xf32>
    %48 = vector.shape_cast %47 : vector<8xf32> to vector<8x1xf32>
    %49 = vector.broadcast %48 : vector<8x1xf32> to vector<8x8xf32>
    %50 = arith.divf %46, %49 : vector<8x8xf32>
    %cst_18 = arith.constant dense<0.000000e+00> : vector<8x8xf32>
    %51 = tpu.matmul %50, %39, %cst_18 {dimension_numbers = #tpu.dot_dimension_numbers<[1], [0], [0], [1], [0, 0, 1, 1], [], []>} : vector<8x8xf32>, vector<8x8xf32>, vector<8x8xf32> -> vector<8x8xf32>
    %52 = vector.extract_strided_slice %19 {offsets = [0, 16], sizes = [8, 8], strides = [1, 1]} : vector<8x32xf32> to vector<8x8xf32>
    %53 = vector.extract_strided_slice %20 {offsets = [0, 16], sizes = [8, 8], strides = [1, 1]} : vector<8x32xf32> to vector<8x8xf32>
    %54 = vector.extract_strided_slice %21 {offsets = [0, 16], sizes = [8, 8], strides = [1, 1]} : vector<8x32xf32> to vector<8x8xf32>
    "tpu.trace_start"() <{level = 10 : i32, message = "qd,kd->qk"}> : () -> ()
    %cst_19 = arith.constant dense<0.000000e+00> : vector<8x8xf32>
    %55 = tpu.matmul %52, %53, %cst_19 {dimension_numbers = #tpu.dot_dimension_numbers<[1], [1], [0], [0], [0, 0, 1, 0], [], []>} : vector<8x8xf32>, vector<8x8xf32>, vector<8x8xf32> -> vector<8x8xf32>
    "tpu.trace_stop"() : () -> ()
    %56 = arith.addf %55, %14 : vector<8x8xf32>
    %cst_20 = arith.constant dense<0xFF800000> : vector<8xf32>
    %57 = vector.multi_reduction <maximumf>, %56, %cst_20 [1] : vector<8x8xf32> to vector<8xf32>
    %58 = vector.shape_cast %57 : vector<8xf32> to vector<8x1xf32>
    %59 = vector.broadcast %58 : vector<8x1xf32> to vector<8x8xf32>
    %60 = arith.subf %56, %59 : vector<8x8xf32>
    %61 = math.exp %60 : vector<8x8xf32>
    %cst_21 = arith.constant dense<0.000000e+00> : vector<8xf32>
    %62 = vector.multi_reduction <add>, %61, %cst_21 [1] : vector<8x8xf32> to vector<8xf32>
    %63 = vector.shape_cast %62 : vector<8xf32> to vector<8x1xf32>
    %64 = vector.broadcast %63 : vector<8x1xf32> to vector<8x8xf32>
    %65 = arith.divf %61, %64 : vector<8x8xf32>
    %cst_22 = arith.constant dense<0.000000e+00> : vector<8x8xf32>
    %66 = tpu.matmul %65, %54, %cst_22 {dimension_numbers = #tpu.dot_dimension_numbers<[1], [0], [0], [1], [0, 0, 1, 1], [], []>} : vector<8x8xf32>, vector<8x8xf32>, vector<8x8xf32> -> vector<8x8xf32>
    %67 = vector.extract_strided_slice %19 {offsets = [0, 24], sizes = [8, 8], strides = [1, 1]} : vector<8x32xf32> to vector<8x8xf32>
    %68 = vector.extract_strided_slice %20 {offsets = [0, 24], sizes = [8, 8], strides = [1, 1]} : vector<8x32xf32> to vector<8x8xf32>
    %69 = vector.extract_strided_slice %21 {offsets = [0, 24], sizes = [8, 8], strides = [1, 1]} : vector<8x32xf32> to vector<8x8xf32>
    "tpu.trace_start"() <{level = 10 : i32, message = "qd,kd->qk"}> : () -> ()
    %cst_23 = arith.constant dense<0.000000e+00> : vector<8x8xf32>
    %70 = tpu.matmul %67, %68, %cst_23 {dimension_numbers = #tpu.dot_dimension_numbers<[1], [1], [0], [0], [0, 0, 1, 0], [], []>} : vector<8x8xf32>, vector<8x8xf32>, vector<8x8xf32> -> vector<8x8xf32>
    "tpu.trace_stop"() : () -> ()
    %71 = arith.addf %70, %14 : vector<8x8xf32>
    %cst_24 = arith.constant dense<0xFF800000> : vector<8xf32>
    %72 = vector.multi_reduction <maximumf>, %71, %cst_24 [1] : vector<8x8xf32> to vector<8xf32>
    %73 = vector.shape_cast %72 : vector<8xf32> to vector<8x1xf32>
    %74 = vector.broadcast %73 : vector<8x1xf32> to vector<8x8xf32>
    %75 = arith.subf %71, %74 : vector<8x8xf32>
    %76 = math.exp %75 : vector<8x8xf32>
    %cst_25 = arith.constant dense<0.000000e+00> : vector<8xf32>
    %77 = vector.multi_reduction <add>, %76, %cst_25 [1] : vector<8x8xf32> to vector<8xf32>
    %78 = vector.shape_cast %77 : vector<8xf32> to vector<8x1xf32>
    %79 = vector.broadcast %78 : vector<8x1xf32> to vector<8x8xf32>
    %80 = arith.divf %76, %79 : vector<8x8xf32>
    %cst_26 = arith.constant dense<0.000000e+00> : vector<8x8xf32>
    %81 = tpu.matmul %80, %69, %cst_26 {dimension_numbers = #tpu.dot_dimension_numbers<[1], [0], [0], [1], [0, 0, 1, 1], [], []>} : vector<8x8xf32>, vector<8x8xf32>, vector<8x8xf32> -> vector<8x8xf32>
    %82 = tpu.concatenate %36, %51, %66, %81 in 1 : vector<8x8xf32>, vector<8x8xf32>, vector<8x8xf32>, vector<8x8xf32> -> vector<8x32xf32>
    %c264 = arith.constant 264 : index
    %c0_27 = arith.constant 0 : index
    %83 = vector.load %arg1[%c264, %c0_27] : memref<680x32xf32, #tpu.memory_space<vmem>>, vector<32x32xf32>
    %c424 = arith.constant 424 : index
    %c0_28 = arith.constant 0 : index
    %84 = vector.load %arg1[%c424, %c0_28] : memref<680x32xf32, #tpu.memory_space<vmem>>, vector<8x32xf32>
    %cst_29 = arith.constant dense<0.000000e+00> : vector<8x32xf32>
    %85 = tpu.matmul %82, %83, %cst_29 {dimension_numbers = #tpu.dot_dimension_numbers<[1], [0], [0], [1], [0, 0, 1, 1], [], []>} : vector<8x32xf32>, vector<32x32xf32>, vector<8x32xf32> -> vector<8x32xf32>
    %86 = arith.addf %85, %84 : vector<8x32xf32>
    %c432 = arith.constant 432 : index
    %c0_30 = arith.constant 0 : index
    %87 = vector.load %arg1[%c432, %c0_30] : memref<680x32xf32, #tpu.memory_space<vmem>>, vector<8x32xf32>
    %c440 = arith.constant 440 : index
    %c0_31 = arith.constant 0 : index
    %88 = vector.load %arg1[%c440, %c0_31] : memref<680x32xf32, #tpu.memory_space<vmem>>, vector<8x32xf32>
    %89 = arith.addf %4, %86 : vector<8x32xf32>
    %cst_32 = arith.constant dense<0.000000e+00> : vector<8xf32>
    %90 = vector.multi_reduction <add>, %89, %cst_32 [1] : vector<8x32xf32> to vector<8xf32>
    %91 = vector.shape_cast %90 : vector<8xf32> to vector<8x1xf32>
    %cst_33 = arith.constant 3.200000e+01 : f32
    %92 = vector.broadcast %cst_33 : f32 to vector<8x1xf32>
    %93 = arith.divf %91, %92 : vector<8x1xf32>
    %94 = vector.broadcast %93 : vector<8x1xf32> to vector<8x32xf32>
    %95 = arith.subf %89, %94 : vector<8x32xf32>
    %96 = arith.mulf %95, %95 : vector<8x32xf32>
    %cst_34 = arith.constant dense<0.000000e+00> : vector<8xf32>
    %97 = vector.multi_reduction <add>, %96, %cst_34 [1] : vector<8x32xf32> to vector<8xf32>
    %98 = vector.shape_cast %97 : vector<8xf32> to vector<8x1xf32>
    %cst_35 = arith.constant 3.200000e+01 : f32
    %99 = vector.broadcast %cst_35 : f32 to vector<8x1xf32>
    %100 = arith.divf %98, %99 : vector<8x1xf32>
    %101 = vector.broadcast %93 : vector<8x1xf32> to vector<8x32xf32>
    %102 = arith.subf %89, %101 : vector<8x32xf32>
    %cst_36 = arith.constant 9.99999974E-6 : f32
    %103 = vector.broadcast %cst_36 : f32 to vector<8x1xf32>
    %104 = arith.addf %100, %103 : vector<8x1xf32>
    %105 = math.rsqrt %104 : vector<8x1xf32>
    %106 = vector.broadcast %105 : vector<8x1xf32> to vector<8x32xf32>
    %107 = arith.mulf %102, %106 : vector<8x32xf32>
    %108 = arith.mulf %107, %87 : vector<8x32xf32>
    %109 = arith.addf %108, %88 : vector<8x32xf32>
    %c0_37 = arith.constant 0 : index
    %c0_38 = arith.constant 0 : index
    %110 = vector.load %arg3[%c0_37, %c0_38] : memref<80x128xf32, #tpu.memory_space<vmem>>, vector<32x128xf32>
    %c32_39 = arith.constant 32 : index
    %c0_40 = arith.constant 0 : index
    %111 = vector.load %arg3[%c32_39, %c0_40] : memref<80x128xf32, #tpu.memory_space<vmem>>, vector<8x128xf32>
    %c296 = arith.constant 296 : index
    %c0_41 = arith.constant 0 : index
    %112 = vector.load %arg1[%c296, %c0_41] : memref<680x32xf32, #tpu.memory_space<vmem>>, vector<128x32xf32>
    %c464 = arith.constant 464 : index
    %c0_42 = arith.constant 0 : index
    %113 = vector.load %arg1[%c464, %c0_42] : memref<680x32xf32, #tpu.memory_space<vmem>>, vector<8x32xf32>
    %cst_43 = arith.constant dense<0.000000e+00> : vector<8x128xf32>
    %114 = tpu.matmul %109, %110, %cst_43 {dimension_numbers = #tpu.dot_dimension_numbers<[1], [0], [0], [1], [0, 0, 1, 1], [], []>} : vector<8x32xf32>, vector<32x128xf32>, vector<8x128xf32> -> vector<8x128xf32>
    %115 = arith.addf %114, %111 : vector<8x128xf32>
    %cst_44 = arith.constant 0.000000e+00 : f32
    %116 = vector.broadcast %cst_44 : f32 to vector<8x128xf32>
    %117 = arith.maximumf %115, %116 : vector<8x128xf32>
    %cst_45 = arith.constant dense<0.000000e+00> : vector<8x32xf32>
    %118 = tpu.matmul %117, %112, %cst_45 {dimension_numbers = #tpu.dot_dimension_numbers<[1], [0], [0], [1], [0, 0, 1, 1], [], []>} : vector<8x128xf32>, vector<128x32xf32>, vector<8x32xf32> -> vector<8x32xf32>
    %119 = arith.addf %118, %113 : vector<8x32xf32>
    %c448 = arith.constant 448 : index
    %c0_46 = arith.constant 0 : index
    %120 = vector.load %arg1[%c448, %c0_46] : memref<680x32xf32, #tpu.memory_space<vmem>>, vector<8x32xf32>
    %c456 = arith.constant 456 : index
    %c0_47 = arith.constant 0 : index
    %121 = vector.load %arg1[%c456, %c0_47] : memref<680x32xf32, #tpu.memory_space<vmem>>, vector<8x32xf32>
    %122 = arith.addf %109, %119 : vector<8x32xf32>
    %cst_48 = arith.constant dense<0.000000e+00> : vector<8xf32>
    %123 = vector.multi_reduction <add>, %122, %cst_48 [1] : vector<8x32xf32> to vector<8xf32>
    %124 = vector.shape_cast %123 : vector<8xf32> to vector<8x1xf32>
    %cst_49 = arith.constant 3.200000e+01 : f32
    %125 = vector.broadcast %cst_49 : f32 to vector<8x1xf32>
    %126 = arith.divf %124, %125 : vector<8x1xf32>
    %127 = vector.broadcast %126 : vector<8x1xf32> to vector<8x32xf32>
    %128 = arith.subf %122, %127 : vector<8x32xf32>
    %129 = arith.mulf %128, %128 : vector<8x32xf32>
    %cst_50 = arith.constant dense<0.000000e+00> : vector<8xf32>
    %130 = vector.multi_reduction <add>, %129, %cst_50 [1] : vector<8x32xf32> to vector<8xf32>
    %131 = vector.shape_cast %130 : vector<8xf32> to vector<8x1xf32>
    %cst_51 = arith.constant 3.200000e+01 : f32
    %132 = vector.broadcast %cst_51 : f32 to vector<8x1xf32>
    %133 = arith.divf %131, %132 : vector<8x1xf32>
    %134 = vector.broadcast %126 : vector<8x1xf32> to vector<8x32xf32>
    %135 = arith.subf %122, %134 : vector<8x32xf32>
    %cst_52 = arith.constant 9.99999974E-6 : f32
    %136 = vector.broadcast %cst_52 : f32 to vector<8x1xf32>
    %137 = arith.addf %133, %136 : vector<8x1xf32>
    %138 = math.rsqrt %137 : vector<8x1xf32>
    %139 = vector.broadcast %138 : vector<8x1xf32> to vector<8x32xf32>
    %140 = arith.mulf %135, %139 : vector<8x32xf32>
    %141 = arith.mulf %140, %120 : vector<8x32xf32>
    %142 = arith.addf %141, %121 : vector<8x32xf32>
    %c40 = arith.constant 40 : index
    %c0_53 = arith.constant 0 : index
    %143 = vector.load %arg2[%c40, %c0_53] : memref<80x96xf32, #tpu.memory_space<vmem>>, vector<32x96xf32>
    %c72 = arith.constant 72 : index
    %c0_54 = arith.constant 0 : index
    %144 = vector.load %arg2[%c72, %c0_54] : memref<80x96xf32, #tpu.memory_space<vmem>>, vector<8x96xf32>
    %cst_55 = arith.constant dense<0.000000e+00> : vector<8x96xf32>
    %145 = tpu.matmul %142, %143, %cst_55 {dimension_numbers = #tpu.dot_dimension_numbers<[1], [0], [0], [1], [0, 0, 1, 1], [], []>} : vector<8x32xf32>, vector<32x96xf32>, vector<8x96xf32> -> vector<8x96xf32>
    %146 = arith.addf %145, %144 : vector<8x96xf32>
    %147 = vector.extract_strided_slice %146 {offsets = [0, 0], sizes = [8, 32], strides = [1, 1]} : vector<8x96xf32> to vector<8x32xf32>
    %148 = vector.extract_strided_slice %146 {offsets = [0, 32], sizes = [8, 32], strides = [1, 1]} : vector<8x96xf32> to vector<8x32xf32>
    %149 = vector.extract_strided_slice %146 {offsets = [0, 64], sizes = [8, 32], strides = [1, 1]} : vector<8x96xf32> to vector<8x32xf32>
    %150 = vector.extract_strided_slice %147 {offsets = [0, 0], sizes = [8, 8], strides = [1, 1]} : vector<8x32xf32> to vector<8x8xf32>
    %151 = vector.extract_strided_slice %148 {offsets = [0, 0], sizes = [8, 8], strides = [1, 1]} : vector<8x32xf32> to vector<8x8xf32>
    %152 = vector.extract_strided_slice %149 {offsets = [0, 0], sizes = [8, 8], strides = [1, 1]} : vector<8x32xf32> to vector<8x8xf32>
    "tpu.trace_start"() <{level = 10 : i32, message = "qd,kd->qk"}> : () -> ()
    %cst_56 = arith.constant dense<0.000000e+00> : vector<8x8xf32>
    %153 = tpu.matmul %150, %151, %cst_56 {dimension_numbers = #tpu.dot_dimension_numbers<[1], [1], [0], [0], [0, 0, 1, 0], [], []>} : vector<8x8xf32>, vector<8x8xf32>, vector<8x8xf32> -> vector<8x8xf32>
    "tpu.trace_stop"() : () -> ()
    %154 = arith.addf %153, %14 : vector<8x8xf32>
    %cst_57 = arith.constant dense<0xFF800000> : vector<8xf32>
    %155 = vector.multi_reduction <maximumf>, %154, %cst_57 [1] : vector<8x8xf32> to vector<8xf32>
    %156 = vector.shape_cast %155 : vector<8xf32> to vector<8x1xf32>
    %157 = vector.broadcast %156 : vector<8x1xf32> to vector<8x8xf32>
    %158 = arith.subf %154, %157 : vector<8x8xf32>
    %159 = math.exp %158 : vector<8x8xf32>
    %cst_58 = arith.constant dense<0.000000e+00> : vector<8xf32>
    %160 = vector.multi_reduction <add>, %159, %cst_58 [1] : vector<8x8xf32> to vector<8xf32>
    %161 = vector.shape_cast %160 : vector<8xf32> to vector<8x1xf32>
    %162 = vector.broadcast %161 : vector<8x1xf32> to vector<8x8xf32>
    %163 = arith.divf %159, %162 : vector<8x8xf32>
    %cst_59 = arith.constant dense<0.000000e+00> : vector<8x8xf32>
    %164 = tpu.matmul %163, %152, %cst_59 {dimension_numbers = #tpu.dot_dimension_numbers<[1], [0], [0], [1], [0, 0, 1, 1], [], []>} : vector<8x8xf32>, vector<8x8xf32>, vector<8x8xf32> -> vector<8x8xf32>
    %165 = vector.extract_strided_slice %147 {offsets = [0, 8], sizes = [8, 8], strides = [1, 1]} : vector<8x32xf32> to vector<8x8xf32>
    %166 = vector.extract_strided_slice %148 {offsets = [0, 8], sizes = [8, 8], strides = [1, 1]} : vector<8x32xf32> to vector<8x8xf32>
    %167 = vector.extract_strided_slice %149 {offsets = [0, 8], sizes = [8, 8], strides = [1, 1]} : vector<8x32xf32> to vector<8x8xf32>
    "tpu.trace_start"() <{level = 10 : i32, message = "qd,kd->qk"}> : () -> ()
    %cst_60 = arith.constant dense<0.000000e+00> : vector<8x8xf32>
    %168 = tpu.matmul %165, %166, %cst_60 {dimension_numbers = #tpu.dot_dimension_numbers<[1], [1], [0], [0], [0, 0, 1, 0], [], []>} : vector<8x8xf32>, vector<8x8xf32>, vector<8x8xf32> -> vector<8x8xf32>
    "tpu.trace_stop"() : () -> ()
    %169 = arith.addf %168, %14 : vector<8x8xf32>
    %cst_61 = arith.constant dense<0xFF800000> : vector<8xf32>
    %170 = vector.multi_reduction <maximumf>, %169, %cst_61 [1] : vector<8x8xf32> to vector<8xf32>
    %171 = vector.shape_cast %170 : vector<8xf32> to vector<8x1xf32>
    %172 = vector.broadcast %171 : vector<8x1xf32> to vector<8x8xf32>
    %173 = arith.subf %169, %172 : vector<8x8xf32>
    %174 = math.exp %173 : vector<8x8xf32>
    %cst_62 = arith.constant dense<0.000000e+00> : vector<8xf32>
    %175 = vector.multi_reduction <add>, %174, %cst_62 [1] : vector<8x8xf32> to vector<8xf32>
    %176 = vector.shape_cast %175 : vector<8xf32> to vector<8x1xf32>
    %177 = vector.broadcast %176 : vector<8x1xf32> to vector<8x8xf32>
    %178 = arith.divf %174, %177 : vector<8x8xf32>
    %cst_63 = arith.constant dense<0.000000e+00> : vector<8x8xf32>
    %179 = tpu.matmul %178, %167, %cst_63 {dimension_numbers = #tpu.dot_dimension_numbers<[1], [0], [0], [1], [0, 0, 1, 1], [], []>} : vector<8x8xf32>, vector<8x8xf32>, vector<8x8xf32> -> vector<8x8xf32>
    %180 = vector.extract_strided_slice %147 {offsets = [0, 16], sizes = [8, 8], strides = [1, 1]} : vector<8x32xf32> to vector<8x8xf32>
    %181 = vector.extract_strided_slice %148 {offsets = [0, 16], sizes = [8, 8], strides = [1, 1]} : vector<8x32xf32> to vector<8x8xf32>
    %182 = vector.extract_strided_slice %149 {offsets = [0, 16], sizes = [8, 8], strides = [1, 1]} : vector<8x32xf32> to vector<8x8xf32>
    "tpu.trace_start"() <{level = 10 : i32, message = "qd,kd->qk"}> : () -> ()
    %cst_64 = arith.constant dense<0.000000e+00> : vector<8x8xf32>
    %183 = tpu.matmul %180, %181, %cst_64 {dimension_numbers = #tpu.dot_dimension_numbers<[1], [1], [0], [0], [0, 0, 1, 0], [], []>} : vector<8x8xf32>, vector<8x8xf32>, vector<8x8xf32> -> vector<8x8xf32>
    "tpu.trace_stop"() : () -> ()
    %184 = arith.addf %183, %14 : vector<8x8xf32>
    %cst_65 = arith.constant dense<0xFF800000> : vector<8xf32>
    %185 = vector.multi_reduction <maximumf>, %184, %cst_65 [1] : vector<8x8xf32> to vector<8xf32>
    %186 = vector.shape_cast %185 : vector<8xf32> to vector<8x1xf32>
    %187 = vector.broadcast %186 : vector<8x1xf32> to vector<8x8xf32>
    %188 = arith.subf %184, %187 : vector<8x8xf32>
    %189 = math.exp %188 : vector<8x8xf32>
    %cst_66 = arith.constant dense<0.000000e+00> : vector<8xf32>
    %190 = vector.multi_reduction <add>, %189, %cst_66 [1] : vector<8x8xf32> to vector<8xf32>
    %191 = vector.shape_cast %190 : vector<8xf32> to vector<8x1xf32>
    %192 = vector.broadcast %191 : vector<8x1xf32> to vector<8x8xf32>
    %193 = arith.divf %189, %192 : vector<8x8xf32>
    %cst_67 = arith.constant dense<0.000000e+00> : vector<8x8xf32>
    %194 = tpu.matmul %193, %182, %cst_67 {dimension_numbers = #tpu.dot_dimension_numbers<[1], [0], [0], [1], [0, 0, 1, 1], [], []>} : vector<8x8xf32>, vector<8x8xf32>, vector<8x8xf32> -> vector<8x8xf32>
    %195 = vector.extract_strided_slice %147 {offsets = [0, 24], sizes = [8, 8], strides = [1, 1]} : vector<8x32xf32> to vector<8x8xf32>
    %196 = vector.extract_strided_slice %148 {offsets = [0, 24], sizes = [8, 8], strides = [1, 1]} : vector<8x32xf32> to vector<8x8xf32>
    %197 = vector.extract_strided_slice %149 {offsets = [0, 24], sizes = [8, 8], strides = [1, 1]} : vector<8x32xf32> to vector<8x8xf32>
    "tpu.trace_start"() <{level = 10 : i32, message = "qd,kd->qk"}> : () -> ()
    %cst_68 = arith.constant dense<0.000000e+00> : vector<8x8xf32>
    %198 = tpu.matmul %195, %196, %cst_68 {dimension_numbers = #tpu.dot_dimension_numbers<[1], [1], [0], [0], [0, 0, 1, 0], [], []>} : vector<8x8xf32>, vector<8x8xf32>, vector<8x8xf32> -> vector<8x8xf32>
    "tpu.trace_stop"() : () -> ()
    %199 = arith.addf %198, %14 : vector<8x8xf32>
    %cst_69 = arith.constant dense<0xFF800000> : vector<8xf32>
    %200 = vector.multi_reduction <maximumf>, %199, %cst_69 [1] : vector<8x8xf32> to vector<8xf32>
    %201 = vector.shape_cast %200 : vector<8xf32> to vector<8x1xf32>
    %202 = vector.broadcast %201 : vector<8x1xf32> to vector<8x8xf32>
    %203 = arith.subf %199, %202 : vector<8x8xf32>
    %204 = math.exp %203 : vector<8x8xf32>
    %cst_70 = arith.constant dense<0.000000e+00> : vector<8xf32>
    %205 = vector.multi_reduction <add>, %204, %cst_70 [1] : vector<8x8xf32> to vector<8xf32>
    %206 = vector.shape_cast %205 : vector<8xf32> to vector<8x1xf32>
    %207 = vector.broadcast %206 : vector<8x1xf32> to vector<8x8xf32>
    %208 = arith.divf %204, %207 : vector<8x8xf32>
    %cst_71 = arith.constant dense<0.000000e+00> : vector<8x8xf32>
    %209 = tpu.matmul %208, %197, %cst_71 {dimension_numbers = #tpu.dot_dimension_numbers<[1], [0], [0], [1], [0, 0, 1, 1], [], []>} : vector<8x8xf32>, vector<8x8xf32>, vector<8x8xf32> -> vector<8x8xf32>
    %210 = tpu.concatenate %164, %179, %194, %209 in 1 : vector<8x8xf32>, vector<8x8xf32>, vector<8x8xf32>, vector<8x8xf32> -> vector<8x32xf32>
    %c472 = arith.constant 472 : index
    %c0_72 = arith.constant 0 : index
    %211 = vector.load %arg1[%c472, %c0_72] : memref<680x32xf32, #tpu.memory_space<vmem>>, vector<32x32xf32>
    %c632 = arith.constant 632 : index
    %c0_73 = arith.constant 0 : index
    %212 = vector.load %arg1[%c632, %c0_73] : memref<680x32xf32, #tpu.memory_space<vmem>>, vector<8x32xf32>
    %cst_74 = arith.constant dense<0.000000e+00> : vector<8x32xf32>
    %213 = tpu.matmul %210, %211, %cst_74 {dimension_numbers = #tpu.dot_dimension_numbers<[1], [0], [0], [1], [0, 0, 1, 1], [], []>} : vector<8x32xf32>, vector<32x32xf32>, vector<8x32xf32> -> vector<8x32xf32>
    %214 = arith.addf %213, %212 : vector<8x32xf32>
    %c640 = arith.constant 640 : index
    %c0_75 = arith.constant 0 : index
    %215 = vector.load %arg1[%c640, %c0_75] : memref<680x32xf32, #tpu.memory_space<vmem>>, vector<8x32xf32>
    %c648 = arith.constant 648 : index
    %c0_76 = arith.constant 0 : index
    %216 = vector.load %arg1[%c648, %c0_76] : memref<680x32xf32, #tpu.memory_space<vmem>>, vector<8x32xf32>
    %217 = arith.addf %142, %214 : vector<8x32xf32>
    %cst_77 = arith.constant dense<0.000000e+00> : vector<8xf32>
    %218 = vector.multi_reduction <add>, %217, %cst_77 [1] : vector<8x32xf32> to vector<8xf32>
    %219 = vector.shape_cast %218 : vector<8xf32> to vector<8x1xf32>
    %cst_78 = arith.constant 3.200000e+01 : f32
    %220 = vector.broadcast %cst_78 : f32 to vector<8x1xf32>
    %221 = arith.divf %219, %220 : vector<8x1xf32>
    %222 = vector.broadcast %221 : vector<8x1xf32> to vector<8x32xf32>
    %223 = arith.subf %217, %222 : vector<8x32xf32>
    %224 = arith.mulf %223, %223 : vector<8x32xf32>
    %cst_79 = arith.constant dense<0.000000e+00> : vector<8xf32>
    %225 = vector.multi_reduction <add>, %224, %cst_79 [1] : vector<8x32xf32> to vector<8xf32>
    %226 = vector.shape_cast %225 : vector<8xf32> to vector<8x1xf32>
    %cst_80 = arith.constant 3.200000e+01 : f32
    %227 = vector.broadcast %cst_80 : f32 to vector<8x1xf32>
    %228 = arith.divf %226, %227 : vector<8x1xf32>
    %229 = vector.broadcast %221 : vector<8x1xf32> to vector<8x32xf32>
    %230 = arith.subf %217, %229 : vector<8x32xf32>
    %cst_81 = arith.constant 9.99999974E-6 : f32
    %231 = vector.broadcast %cst_81 : f32 to vector<8x1xf32>
    %232 = arith.addf %228, %231 : vector<8x1xf32>
    %233 = math.rsqrt %232 : vector<8x1xf32>
    %234 = vector.broadcast %233 : vector<8x1xf32> to vector<8x32xf32>
    %235 = arith.mulf %230, %234 : vector<8x32xf32>
    %236 = arith.mulf %235, %215 : vector<8x32xf32>
    %237 = arith.addf %236, %216 : vector<8x32xf32>
    %c40_82 = arith.constant 40 : index
    %c0_83 = arith.constant 0 : index
    %238 = vector.load %arg3[%c40_82, %c0_83] : memref<80x128xf32, #tpu.memory_space<vmem>>, vector<32x128xf32>
    %c72_84 = arith.constant 72 : index
    %c0_85 = arith.constant 0 : index
    %239 = vector.load %arg3[%c72_84, %c0_85] : memref<80x128xf32, #tpu.memory_space<vmem>>, vector<8x128xf32>
    %c504 = arith.constant 504 : index
    %c0_86 = arith.constant 0 : index
    %240 = vector.load %arg1[%c504, %c0_86] : memref<680x32xf32, #tpu.memory_space<vmem>>, vector<128x32xf32>
    %c672 = arith.constant 672 : index
    %c0_87 = arith.constant 0 : index
    %241 = vector.load %arg1[%c672, %c0_87] : memref<680x32xf32, #tpu.memory_space<vmem>>, vector<8x32xf32>
    %cst_88 = arith.constant dense<0.000000e+00> : vector<8x128xf32>
    %242 = tpu.matmul %237, %238, %cst_88 {dimension_numbers = #tpu.dot_dimension_numbers<[1], [0], [0], [1], [0, 0, 1, 1], [], []>} : vector<8x32xf32>, vector<32x128xf32>, vector<8x128xf32> -> vector<8x128xf32>
    %243 = arith.addf %242, %239 : vector<8x128xf32>
    %cst_89 = arith.constant 0.000000e+00 : f32
    %244 = vector.broadcast %cst_89 : f32 to vector<8x128xf32>
    %245 = arith.maximumf %243, %244 : vector<8x128xf32>
    %cst_90 = arith.constant dense<0.000000e+00> : vector<8x32xf32>
    %246 = tpu.matmul %245, %240, %cst_90 {dimension_numbers = #tpu.dot_dimension_numbers<[1], [0], [0], [1], [0, 0, 1, 1], [], []>} : vector<8x128xf32>, vector<128x32xf32>, vector<8x32xf32> -> vector<8x32xf32>
    %247 = arith.addf %246, %241 : vector<8x32xf32>
    %c656 = arith.constant 656 : index
    %c0_91 = arith.constant 0 : index
    %248 = vector.load %arg1[%c656, %c0_91] : memref<680x32xf32, #tpu.memory_space<vmem>>, vector<8x32xf32>
    %c664 = arith.constant 664 : index
    %c0_92 = arith.constant 0 : index
    %249 = vector.load %arg1[%c664, %c0_92] : memref<680x32xf32, #tpu.memory_space<vmem>>, vector<8x32xf32>
    %250 = arith.addf %237, %247 : vector<8x32xf32>
    %cst_93 = arith.constant dense<0.000000e+00> : vector<8xf32>
    %251 = vector.multi_reduction <add>, %250, %cst_93 [1] : vector<8x32xf32> to vector<8xf32>
    %252 = vector.shape_cast %251 : vector<8xf32> to vector<8x1xf32>
    %cst_94 = arith.constant 3.200000e+01 : f32
    %253 = vector.broadcast %cst_94 : f32 to vector<8x1xf32>
    %254 = arith.divf %252, %253 : vector<8x1xf32>
    %255 = vector.broadcast %254 : vector<8x1xf32> to vector<8x32xf32>
    %256 = arith.subf %250, %255 : vector<8x32xf32>
    %257 = arith.mulf %256, %256 : vector<8x32xf32>
    %cst_95 = arith.constant dense<0.000000e+00> : vector<8xf32>
    %258 = vector.multi_reduction <add>, %257, %cst_95 [1] : vector<8x32xf32> to vector<8xf32>
    %259 = vector.shape_cast %258 : vector<8xf32> to vector<8x1xf32>
    %cst_96 = arith.constant 3.200000e+01 : f32
    %260 = vector.broadcast %cst_96 : f32 to vector<8x1xf32>
    %261 = arith.divf %259, %260 : vector<8x1xf32>
    %262 = vector.broadcast %254 : vector<8x1xf32> to vector<8x32xf32>
    %263 = arith.subf %250, %262 : vector<8x32xf32>
    %cst_97 = arith.constant 9.99999974E-6 : f32
    %264 = vector.broadcast %cst_97 : f32 to vector<8x1xf32>
    %265 = arith.addf %261, %264 : vector<8x1xf32>
    %266 = math.rsqrt %265 : vector<8x1xf32>
    %267 = vector.broadcast %266 : vector<8x1xf32> to vector<8x32xf32>
    %268 = arith.mulf %263, %267 : vector<8x32xf32>
    %269 = arith.mulf %268, %248 : vector<8x32xf32>
    %270 = arith.addf %269, %249 : vector<8x32xf32>
    %c0_98 = arith.constant 0 : index
    %c0_99 = arith.constant 0 : index
    %271 = vector.load %arg4[%c0_98, %c0_99] : memref<8x32xf32, #tpu.memory_space<vmem>>, vector<8x32xf32>
    tpu.vector_store %arg4[%c0_98, %c0_99], %270 {strides = array<i32>} : memref<8x32xf32, #tpu.memory_space<vmem>>, vector<8x32xf32>,
    return
  }
}

</mosaic_0001>

<llo_original>
// kernel: tpu_custom_call.1
$region0: #{tpu_custom_call.1}
  #allocation0 [shape = 'u32[]', space=smem, size = 0x4, offset = 0x4, fixed_abs, tag = 'smem constant byte address 0x4 - core index']
  #allocation1 [shape = 'u32[144,128]{1,0:T(1,128)}', space=vmem, size = 0x12000, scoped, tag = 'internal scratch']
  %s0 = inlined_call_operand.vmem [shape: f32[8,256], index: 0, kind: input, shape index: {}]
  %s1 = inlined_call_operand.vmem [shape: f32[680,32], index: 1, kind: input, shape index: {}]
  %s2 = inlined_call_operand.vmem [shape: f32[80,96], index: 2, kind: input, shape index: {}]
  %s3 = inlined_call_operand.vmem [shape: f32[80,128], index: 3, kind: input, shape index: {}]
  %s4 = inlined_call_operand.hbm [shape: f32[8,32], index: 4, kind: output, shape index: {}]
  %s5 = sld [smem:[#allocation0]]
  $region26: #{tpu_custom_call.1} parent=0
    _
  %s7 = ssub.s32 1, %s5
  %s8 = scalar_select 0, %s7, %s5
  $region1: #{tpu_custom_call.1} parent=0
    #allocation2 [shape = 'u8[4096]{0}', space=vmem, size = 0x1000, scoped, tag = 'output window, operand 0, single buffered']
    #allocation3 [shape = 's32[1]{0}', space=sflag, size = 0x4, scoped, tag = 'scoped memory for tpu_custom_call.1']
    %9 = vsyncpa [#allocation3], 0
    // Predicated region
    $region2: #{tpu_custom_call.1} parent=1 // pred_check
      _
    $region3: #{tpu_custom_call.1} parent=1 // pred_check_branch
      %11 = sbr.rel (0) target = $region5
    $region4: #{tpu_custom_call.1} parent=1 // pred_region
      _
    $region5: #{tpu_custom_call.1} parent=1 // pred_fallthru
      _
    // Predicated region
    $region6: #{tpu_custom_call.1} parent=1 // pred_check
      _
    $region7: #{tpu_custom_call.1} parent=1 // pred_check_branch
      %13 = sbr.rel (0) target = $region9
    $region8: #{tpu_custom_call.1} parent=1 // pred_region
      _
    $region9: #{tpu_custom_call.1} parent=1 // pred_fallthru
      _
    // Predicated region
    $region10: #{tpu_custom_call.1} parent=1 // pred_check
      _
    $region11: #{tpu_custom_call.1} parent=1 // pred_check_branch
      %15 = sbr.rel (0) target = $region13
    $region12: #{tpu_custom_call.1} parent=1 // pred_region
      _
    $region13: #{tpu_custom_call.1} parent=1 // pred_fallthru
      _
    // Predicated region
    $region14: #{tpu_custom_call.1} parent=1 // pred_check
      _
    $region15: #{tpu_custom_call.1} parent=1 // pred_check_branch
      %17 = sbr.rel (0) target = $region17
    $region16: #{tpu_custom_call.1} parent=1 // pred_region
      _
    $region17: #{tpu_custom_call.1} parent=1 // pred_fallthru
      _
    %v18 = vld [vmem:[%s1] sm:$0xff]
    %v19 = vld [vmem:[%s1 + $0x8] sm:$0xff]
    %v20 = vld [vmem:[%s1 + $0x10] sm:$0xff]
    %v21 = vld [vmem:[%s1 + $0x18] sm:$0xff]
    %v22 = vld [vmem:[%s1 + $0x20] sm:$0xff]
    %v23 = vld [vmem:[%s1 + $0x28] sm:$0xff]
    %v24 = vld [vmem:[%s1 + $0x30] sm:$0xff]
    %v25 = vld [vmem:[%s1 + $0x38] sm:$0xff]
    %v26 = vld [vmem:[%s1 + $0x40] sm:$0xff]
    %v27 = vld [vmem:[%s1 + $0x48] sm:$0xff]
    %v28 = vld [vmem:[%s1 + $0x50] sm:$0xff]
    %v29 = vld [vmem:[%s1 + $0x58] sm:$0xff]
    %v30 = vld [vmem:[%s1 + $0x60] sm:$0xff]
    %v31 = vld [vmem:[%s1 + $0x68] sm:$0xff]
    %v32 = vld [vmem:[%s1 + $0x70] sm:$0xff]
    %v33 = vld [vmem:[%s1 + $0x78] sm:$0xff]
    %v34 = vld [vmem:[%s1 + $0x80] sm:$0xff]
    %v35 = vld [vmem:[%s1 + $0x88] sm:$0xff]
    %v36 = vld [vmem:[%s1 + $0x90] sm:$0xff]
    %v37 = vld [vmem:[%s1 + $0x98] sm:$0xff]
    %v38 = vld [vmem:[%s1 + $0xa0] sm:$0xff]
    %v39 = vld [vmem:[%s1 + $0xa8] sm:$0xff]
    %v40 = vld [vmem:[%s1 + $0xb0] sm:$0xff]
    %v41 = vld [vmem:[%s1 + $0xb8] sm:$0xff]
    %v42 = vld [vmem:[%s1 + $0xc0] sm:$0xff]
    %v43 = vld [vmem:[%s1 + $0xc8] sm:$0xff]
    %v44 = vld [vmem:[%s1 + $0xd0] sm:$0xff]
    %v45 = vld [vmem:[%s1 + $0xd8] sm:$0xff]
    %v46 = vld [vmem:[%s1 + $0xe0] sm:$0xff]
    %v47 = vld [vmem:[%s1 + $0xe8] sm:$0xff]
    %v48 = vld [vmem:[%s1 + $0xf0] sm:$0xff]
    %v49 = vld [vmem:[%s1 + $0xf8] sm:$0xff]
    %v50 = vld [vmem:[%s1 + $0x100] sm:$0xff]
    %v51 = vld [vmem:[%s0] sm:$0xff]
    %v52 = vld [vmem:[%s0 + $0x8] sm:$0xff]
    %53 = vmatprep.subr.mxu0 0.0
    %54 = vmatpush1.msra.mxu0 %v33
    %55 = vmatprep.subr.mxu0 0.0
    %56 = vmatpush1.msra.mxu0 %v32
    %57 = vmatprep.subr.mxu0 0.0
    %58 = vmatpush1.msra.mxu0 %v31
    %59 = vmatprep.subr.mxu0 0.0
    %60 = vmatpush1.msra.mxu0 %v30
    %61 = vmatprep.subr.mxu0 0.0
    %62 = vmatpush1.msra.mxu0 %v29
    %63 = vmatprep.subr.mxu0 0.0
    %64 = vmatpush1.msra.mxu0 %v28
    %65 = vmatprep.subr.mxu0 0.0
    %66 = vmatpush1.msra.mxu0 %v27
    %67 = vmatprep.subr.mxu0 0.0
    %68 = vmatpush1.msra.mxu0 %v26
    %69 = vmatprep.subr.mxu0 0.0
    %70 = vmatpush1.msra.mxu0 %v25
    %71 = vmatprep.subr.mxu0 0.0
    %72 = vmatpush1.msra.mxu0 %v24
    %73 = vmatprep.subr.mxu0 0.0
    %74 = vmatpush1.msra.mxu0 %v23
    %75 = vmatprep.subr.mxu0 0.0
    %76 = vmatpush1.msra.mxu0 %v22
    %77 = vmatprep.subr.mxu0 0.0
    %78 = vmatpush1.msra.mxu0 %v21
    %79 = vmatprep.subr.mxu0 0.0
    %80 = vmatpush1.msra.mxu0 %v20
    %81 = vmatprep.subr.mxu0 0.0
    %82 = vmatpush1.msra.mxu0 %v19
    %83 = vmatprep.subr.mxu0 0.0
    %84 = vmatpush1.msra.mxu0 %v18
    %85 = vmatprep.subr.mxu0 0.0
    %86 = vmatpush2.msra.mxu0 %v49
    %87 = vmatprep.subr.mxu0 0.0
    %88 = vmatpush2.msra.mxu0 %v48
    %89 = vmatprep.subr.mxu0 0.0
    %90 = vmatpush2.msra.mxu0 %v47
    %91 = vmatprep.subr.mxu0 0.0
    %92 = vmatpush2.msra.mxu0 %v46
    %93 = vmatprep.subr.mxu0 0.0
    %94 = vmatpush2.msra.mxu0 %v45
    %95 = vmatprep.subr.mxu0 0.0
    %96 = vmatpush2.msra.mxu0 %v44
    %97 = vmatprep.subr.mxu0 0.0
    %98 = vmatpush2.msra.mxu0 %v43
    %99 = vmatprep.subr.mxu0 0.0
    %100 = vmatpush2.msra.mxu0 %v42
    %101 = vmatprep.subr.mxu0 0.0
    %102 = vmatpush2.msra.mxu0 %v41
    %103 = vmatprep.subr.mxu0 0.0
    %104 = vmatpush2.msra.mxu0 %v40
    %105 = vmatprep.subr.mxu0 0.0
    %106 = vmatpush2.msra.mxu0 %v39
    %107 = vmatprep.subr.mxu0 0.0
    %108 = vmatpush2.msra.mxu0 %v38
    %109 = vmatprep.subr.mxu0 0.0
    %110 = vmatpush2.msra.mxu0 %v37
    %111 = vmatprep.subr.mxu0 0.0
    %112 = vmatpush2.msra.mxu0 %v36
    %113 = vmatprep.subr.mxu0 0.0
    %114 = vmatpush2.msra.mxu0 %v35
    %115 = vmatprep.subr.mxu0 0.0
    %116 = vmatpush2.msra.mxu0 %v34
    %117 = vmatprep.mubr.f32.mxu0 %v52
    %118 = vmatmul.mubr.f32.gmra.mxu0 %v51
    %v119 = vpop.f32.mrf.mxu0
    %v120 = vadd.f32 %v50, %v119
    %v121 = vpop.f32.mrf.mxu0
    %122 = vdwg.mxu0
    %v123 = vlaneseq
    %v124 = vshrl.u32 %v123, 7
    %v125 = vlaneseq
    %v126 = vand.u32 %v125, 127
    %v127 = vshra.s32 %v124, 2
    %v128 = vshra.s32 %v126, 2
    %vm129 = vcmp.eq.s32.totalorder %v127, %v128
    %v130 = vsel %vm129, 0.0, -1e+30
    %v131 = vld [vmem:[%s2] sm:$0xff]
    %v132 = vld [vmem:[%s2 + $0x8] sm:$0xff]
    %v133 = vld [vmem:[%s2 + $0x10] sm:$0xff]
    %v134 = vld [vmem:[%s2 + $0x18] sm:$0xff]
    %v135 = vld [vmem:[%s2 + $0x20] sm:$0xff]
    %vm136 = vcmask 261120
    %v138 = vsel %vm136, %v120, 0
    %140 = vmatprep.subr.mxu0 0.0
    %141 = vmatpush1.msra.mxu0 0.0
    %142 = vmatprep.subr.mxu0 0.0
    %143 = vmatpush1.msra.mxu0 0.0
    %144 = vmatprep.subr.mxu0 0.0
    %145 = vmatpush1.msra.mxu0 0.0
    %146 = vmatprep.subr.mxu0 0.0
    %147 = vmatpush1.msra.mxu0 0.0
    %148 = vmatprep.subr.mxu0 0.0
    %149 = vmatpush1.msra.mxu0 0.0
    %150 = vmatprep.subr.mxu0 0.0
    %151 = vmatpush1.msra.mxu0 0.0
    %152 = vmatprep.subr.mxu0 0.0
    %153 = vmatpush1.msra.mxu0 0.0
    %154 = vmatprep.subr.mxu0 0.0
    %155 = vmatpush1.msra.mxu0 0.0
    %156 = vmatprep.subr.mxu0 0.0
    %157 = vmatpush1.msra.mxu0 0.0
    %158 = vmatprep.subr.mxu0 0.0
    %159 = vmatpush1.msra.mxu0 0.0
    %160 = vmatprep.subr.mxu0 0.0
    %161 = vmatpush1.msra.mxu0 0.0
    %162 = vmatprep.subr.mxu0 0.0
    %163 = vmatpush1.msra.mxu0 0.0
    %164 = vmatprep.subr.mxu0 0.0
    %165 = vmatpush1.msra.mxu0 %v134
    %166 = vmatprep.subr.mxu0 0.0
    %167 = vmatpush1.msra.mxu0 %v133
    %168 = vmatprep.subr.mxu0 0.0
    %169 = vmatpush1.msra.mxu0 %v132
    %170 = vmatprep.subr.mxu0 0.0
    %171 = vmatpush1.msra.mxu0 %v131
    %172 = vmatprep.subr.mxu0 0.0
    %173 = vmatpush2.msra.mxu0 0.0
    %174 = vmatprep.subr.mxu0 0.0
    %175 = vmatpush2.msra.mxu0 0.0
    %176 = vmatprep.subr.mxu0 0.0
    %177 = vmatpush2.msra.mxu0 0.0
    %178 = vmatprep.subr.mxu0 0.0
    %179 = vmatpush2.msra.mxu0 0.0
    %180 = vmatprep.subr.mxu0 0.0
    %181 = vmatpush2.msra.mxu0 0.0
    %182 = vmatprep.subr.mxu0 0.0
    %183 = vmatpush2.msra.mxu0 0.0
    %184 = vmatprep.subr.mxu0 0.0
    %185 = vmatpush2.msra.mxu0 0.0
    %186 = vmatprep.subr.mxu0 0.0
    %187 = vmatpush2.msra.mxu0 0.0
    %188 = vmatprep.subr.mxu0 0.0
    %189 = vmatpush2.msra.mxu0 0.0
    %190 = vmatprep.subr.mxu0 0.0
    %191 = vmatpush2.msra.mxu0 0.0
    %192 = vmatprep.subr.mxu0 0.0
    %193 = vmatpush2.msra.mxu0 0.0
    %194 = vmatprep.subr.mxu0 0.0
    %195 = vmatpush2.msra.mxu0 0.0
    %196 = vmatprep.subr.mxu0 0.0
    %197 = vmatpush2.msra.mxu0 0.0
    %198 = vmatprep.subr.mxu0 0.0
    %199 = vmatpush2.msra.mxu0 0.0
    %200 = vmatprep.subr.mxu0 0.0
    %201 = vmatpush2.msra.mxu0 0.0
    %202 = vmatprep.subr.mxu0 0.0
    %203 = vmatpush2.msra.mxu0 0.0
    %204 = vmatprep.mubr.f32.mxu0 0.0
    %205 = vmatmul.mubr.f32.gmra.mxu0 %v138
    %v206 = vpop.f32.mrf.mxu0
    %v207 = vadd.f32 %v135, %v206
    %v208 = vpop.f32.mrf.mxu0
    %209 = vdwg.mxu0
    %211 = vrot.lane.b32.xlu0 %v207, 96
    %v212 = vpop.permute.xlu0 %211
    %vm213 = vcmask 64512
    %v214 = vsel %vm213, %v207, 0
    %v216 = vsel %vm213, %v212, 0
    %218 = vmatprep.subr.mxu0 0.0
    %219 = vmatpush1.xpose.msra.mxu0 0.0
    %220 = vmatprep.subr.mxu0 0.0
    %221 = vmatpush1.xpose.msra.mxu0 0.0
    %222 = vmatprep.subr.mxu0 0.0
    %223 = vmatpush1.xpose.msra.mxu0 0.0
    %224 = vmatprep.subr.mxu0 0.0
    %225 = vmatpush1.xpose.msra.mxu0 0.0
    %226 = vmatprep.subr.mxu0 0.0
    %227 = vmatpush1.xpose.msra.mxu0 0.0
    %228 = vmatprep.subr.mxu0 0.0
    %229 = vmatpush1.xpose.msra.mxu0 0.0
    %230 = vmatprep.subr.mxu0 0.0
    %231 = vmatpush1.xpose.msra.mxu0 0.0
    %232 = vmatprep.subr.mxu0 0.0
    %233 = vmatpush1.xpose.msra.mxu0 0.0
    %234 = vmatprep.subr.mxu0 0.0
    %235 = vmatpush1.xpose.msra.mxu0 0.0
    %236 = vmatprep.subr.mxu0 0.0
    %237 = vmatpush1.xpose.msra.mxu0 0.0
    %238 = vmatprep.subr.mxu0 0.0
    %239 = vmatpush1.xpose.msra.mxu0 0.0
    %240 = vmatprep.subr.mxu0 0.0
    %241 = vmatpush1.xpose.msra.mxu0 0.0
    %242 = vmatprep.subr.mxu0 0.0
    %243 = vmatpush1.xpose.msra.mxu0 0.0
    %244 = vmatprep.subr.mxu0 0.0
    %245 = vmatpush1.xpose.msra.mxu0 0.0
    %246 = vmatprep.subr.mxu0 0.0
    %247 = vmatpush1.xpose.msra.mxu0 0.0
    %248 = vmatprep.subr.mxu0 0.0
    %249 = vmatpush1.xpose.msra.mxu0 %v216
    %250 = vmatprep.subr.mxu0 0.0
    %251 = vmatpush2.xpose.msra.mxu0 0.0
    %252 = vmatprep.subr.mxu0 0.0
    %253 = vmatpush2.xpose.msra.mxu0 0.0
    %254 = vmatprep.subr.mxu0 0.0
    %255 = vmatpush2.xpose.msra.mxu0 0.0
    %256 = vmatprep.subr.mxu0 0.0
    %257 = vmatpush2.xpose.msra.mxu0 0.0
    %258 = vmatprep.subr.mxu0 0.0
    %259 = vmatpush2.xpose.msra.mxu0 0.0
    %260 = vmatprep.subr.mxu0 0.0
    %261 = vmatpush2.xpose.msra.mxu0 0.0
    %262 = vmatprep.subr.mxu0 0.0
    %263 = vmatpush2.xpose.msra.mxu0 0.0
    %264 = vmatprep.subr.mxu0 0.0
    %265 = vmatpush2.xpose.msra.mxu0 0.0
    %266 = vmatprep.subr.mxu0 0.0
    %267 = vmatpush2.xpose.msra.mxu0 0.0
    %268 = vmatprep.subr.mxu0 0.0
    %269 = vmatpush2.xpose.msra.mxu0 0.0
    %270 = vmatprep.subr.mxu0 0.0
    %271 = vmatpush2.xpose.msra.mxu0 0.0
    %272 = vmatprep.subr.mxu0 0.0
    %273 = vmatpush2.xpose.msra.mxu0 0.0
    %274 = vmatprep.subr.mxu0 0.0
    %275 = vmatpush2.xpose.msra.mxu0 0.0
    %276 = vmatprep.subr.mxu0 0.0
    %277 = vmatpush2.xpose.msra.mxu0 0.0
    %278 = vmatprep.subr.mxu0 0.0
    %279 = vmatpush2.xpose.msra.mxu0 0.0
    %280 = vmatprep.subr.mxu0 0.0
    %281 = vmatpush2.xpose.msra.mxu0 0.0
    %282 = vmatprep.mubr.f32.mxu0 0.0
    %283 = vmatmul.mubr.f32.gmra.mxu0 %v214
    %v284 = vpop.f32.mrf.mxu0
    %v285 = vadd.f32 %v130, %v284
    %v286 = vpop.f32.mrf.mxu0
    %287 = vdwg.mxu0
    %v288 = vsel %vm213, %v285, -inf
    %289 = vmax.xlane.f32.xlu0 %v288
    %v290 = vpop.xlane.xlu0 %289
    %v291 = vsub.f32 %v285, %v290
    %v292 = vmul.f32 %v291, 1.442695
    %v293 = vpow.pop %v292
    %v294 = vsel %vm213, %v293, 0.0
    %295 = vadd.xlane.f32.xlu0 %v294
    %v296 = vpop.xlane.xlu0 %295
    %v297 = vrcp.pop %v296
    %v298 = vmul.f32 %v293, %v297
    %299 = vrot.lane.b32.xlu0 %v207, 64
    %v300 = vpop.permute.xlu0 %299
    %v303 = vsel %vm213, %v298, 0
    %305 = vmatprep.subr.mxu0 0.0
    %306 = vmatpush1.msra.mxu0 0.0
    %307 = vmatprep.subr.mxu0 0.0
    %308 = vmatpush1.msra.mxu0 0.0
    %309 = vmatprep.subr.mxu0 0.0
    %310 = vmatpush1.msra.mxu0 0.0
    %311 = vmatprep.subr.mxu0 0.0
    %312 = vmatpush1.msra.mxu0 0.0
    %313 = vmatprep.subr.mxu0 0.0
    %314 = vmatpush1.msra.mxu0 0.0
    %315 = vmatprep.subr.mxu0 0.0
    %316 = vmatpush1.msra.mxu0 0.0
    %317 = vmatprep.subr.mxu0 0.0
    %318 = vmatpush1.msra.mxu0 0.0
    %319 = vmatprep.subr.mxu0 0.0
    %320 = vmatpush1.msra.mxu0 0.0
    %321 = vmatprep.subr.mxu0 0.0
    %322 = vmatpush1.msra.mxu0 0.0
    %323 = vmatprep.subr.mxu0 0.0
    %324 = vmatpush1.msra.mxu0 0.0
    %325 = vmatprep.subr.mxu0 0.0
    %326 = vmatpush1.msra.mxu0 0.0
    %327 = vmatprep.subr.mxu0 0.0
    %328 = vmatpush1.msra.mxu0 0.0
    %329 = vmatprep.subr.mxu0 0.0
    %330 = vmatpush1.msra.mxu0 0.0
    %331 = vmatprep.subr.mxu0 0.0
    %332 = vmatpush1.msra.mxu0 0.0
    %333 = vmatprep.subr.mxu0 0.0
    %334 = vmatpush1.msra.mxu0 0.0
    %335 = vmatprep.subr.mxu0 0.0
    %336 = vmatpush1.msra.mxu0 %v300
    %337 = vmatprep.subr.mxu0 0.0
    %338 = vmatpush2.msra.mxu0 0.0
    %339 = vmatprep.subr.mxu0 0.0
    %340 = vmatpush2.msra.mxu0 0.0
    %341 = vmatprep.subr.mxu0 0.0
    %342 = vmatpush2.msra.mxu0 0.0
    %343 = vmatprep.subr.mxu0 0.0
    %344 = vmatpush2.msra.mxu0 0.0
    %345 = vmatprep.subr.mxu0 0.0
    %346 = vmatpush2.msra.mxu0 0.0
    %347 = vmatprep.subr.mxu0 0.0
    %348 = vmatpush2.msra.mxu0 0.0
    %349 = vmatprep.subr.mxu0 0.0
    %350 = vmatpush2.msra.mxu0 0.0
    %351 = vmatprep.subr.mxu0 0.0
    %352 = vmatpush2.msra.mxu0 0.0
    %353 = vmatprep.subr.mxu0 0.0
    %354 = vmatpush2.msra.mxu0 0.0
    %355 = vmatprep.subr.mxu0 0.0
    %356 = vmatpush2.msra.mxu0 0.0
    %357 = vmatprep.subr.mxu0 0.0
    %358 = vmatpush2.msra.mxu0 0.0
    %359 = vmatprep.subr.mxu0 0.0
    %360 = vmatpush2.msra.mxu0 0.0
    %361 = vmatprep.subr.mxu0 0.0
    %362 = vmatpush2.msra.mxu0 0.0
    %363 = vmatprep.subr.mxu0 0.0
    %364 = vmatpush2.msra.mxu0 0.0
    %365 = vmatprep.subr.mxu0 0.0
    %366 = vmatpush2.msra.mxu0 0.0
    %367 = vmatprep.subr.mxu0 0.0
    %368 = vmatpush2.msra.mxu0 0.0
    %369 = vmatprep.mubr.f32.mxu0 0.0
    %370 = vmatmul.mubr.f32.gmra.mxu0 %v303
    %v371 = vpop.f32.mrf.mxu0
    %v372 = vadd.f32 0.0, %v371
    %v373 = vpop.f32.mrf.mxu0
    %374 = vdwg.mxu0
    %375 = vrot.lane.b32.xlu0 %v207, 120
    %v376 = vpop.permute.xlu0 %375
    %377 = vrot.lane.b32.xlu0 %v207, 88
    %v378 = vpop.permute.xlu0 %377
    %v379 = vsel %vm213, %v376, 0
    %v381 = vsel %vm213, %v378, 0
    %383 = vmatprep.subr.mxu0 0.0
    %384 = vmatpush1.xpose.msra.mxu0 0.0
    %385 = vmatprep.subr.mxu0 0.0
    %386 = vmatpush1.xpose.msra.mxu0 0.0
    %387 = vmatprep.subr.mxu0 0.0
    %388 = vmatpush1.xpose.msra.mxu0 0.0
    %389 = vmatprep.subr.mxu0 0.0
    %390 = vmatpush1.xpose.msra.mxu0 0.0
    %391 = vmatprep.subr.mxu0 0.0
    %392 = vmatpush1.xpose.msra.mxu0 0.0
    %393 = vmatprep.subr.mxu0 0.0
    %394 = vmatpush1.xpose.msra.mxu0 0.0
    %395 = vmatprep.subr.mxu0 0.0
    %396 = vmatpush1.xpose.msra.mxu0 0.0
    %397 = vmatprep.subr.mxu0 0.0
    %398 = vmatpush1.xpose.msra.mxu0 0.0
    %399 = vmatprep.subr.mxu0 0.0
    %400 = vmatpush1.xpose.msra.mxu0 0.0
    %401 = vmatprep.subr.mxu0 0.0
    %402 = vmatpush1.xpose.msra.mxu0 0.0
    %403 = vmatprep.subr.mxu0 0.0
    %404 = vmatpush1.xpose.msra.mxu0 0.0
    %405 = vmatprep.subr.mxu0 0.0
    %406 = vmatpush1.xpose.msra.mxu0 0.0
    %407 = vmatprep.subr.mxu0 0.0
    %408 = vmatpush1.xpose.msra.mxu0 0.0
    %409 = vmatprep.subr.mxu0 0.0
    %410 = vmatpush1.xpose.msra.mxu0 0.0
    %411 = vmatprep.subr.mxu0 0.0
    %412 = vmatpush1.xpose.msra.mxu0 0.0
    %413 = vmatprep.subr.mxu0 0.0
    %414 = vmatpush1.xpose.msra.mxu0 %v381
    %415 = vmatprep.subr.mxu0 0.0
    %416 = vmatpush2.xpose.msra.mxu0 0.0
    %417 = vmatprep.subr.mxu0 0.0
    %418 = vmatpush2.xpose.msra.mxu0 0.0
    %419 = vmatprep.subr.mxu0 0.0
    %420 = vmatpush2.xpose.msra.mxu0 0.0
    %421 = vmatprep.subr.mxu0 0.0
    %422 = vmatpush2.xpose.msra.mxu0 0.0
    %423 = vmatprep.subr.mxu0 0.0
    %424 = vmatpush2.xpose.msra.mxu0 0.0
    %425 = vmatprep.subr.mxu0 0.0
    %426 = vmatpush2.xpose.msra.mxu0 0.0
    %427 = vmatprep.subr.mxu0 0.0
    %428 = vmatpush2.xpose.msra.mxu0 0.0
    %429 = vmatprep.subr.mxu0 0.0
    %430 = vmatpush2.xpose.msra.mxu0 0.0
    %431 = vmatprep.subr.mxu0 0.0
    %432 = vmatpush2.xpose.msra.mxu0 0.0
    %433 = vmatprep.subr.mxu0 0.0
    %434 = vmatpush2.xpose.msra.mxu0 0.0
    %435 = vmatprep.subr.mxu0 0.0
    %436 = vmatpush2.xpose.msra.mxu0 0.0
    %437 = vmatprep.subr.mxu0 0.0
    %438 = vmatpush2.xpose.msra.mxu0 0.0
    %439 = vmatprep.subr.mxu0 0.0
    %440 = vmatpush2.xpose.msra.mxu0 0.0
    %441 = vmatprep.subr.mxu0 0.0
    %442 = vmatpush2.xpose.msra.mxu0 0.0
    %443 = vmatprep.subr.mxu0 0.0
    %444 = vmatpush2.xpose.msra.mxu0 0.0
    %445 = vmatprep.subr.mxu0 0.0
    %446 = vmatpush2.xpose.msra.mxu0 0.0
    %447 = vmatprep.mubr.f32.mxu0 0.0
    %448 = vmatmul.mubr.f32.gmra.mxu0 %v379
    %v449 = vpop.f32.mrf.mxu0
    %v450 = vadd.f32 %v130, %v449
    %v451 = vpop.f32.mrf.mxu0
    %452 = vdwg.mxu0
    %v453 = vsel %vm213, %v450, -inf
    %454 = vmax.xlane.f32.xlu0 %v453
    %v455 = vpop.xlane.xlu0 %454
    %v456 = vsub.f32 %v450, %v455
    %v457 = vmul.f32 %v456, 1.442695
    %v458 = vpow.pop %v457
    %v459 = vsel %vm213, %v458, 0.0
    %460 = vadd.xlane.f32.xlu0 %v459
    %v461 = vpop.xlane.xlu0 %460
    %v462 = vrcp.pop %v461
    %v463 = vmul.f32 %v458, %v462
    %464 = vrot.lane.b32.xlu0 %v207, 56
    %v465 = vpop.permute.xlu0 %464
    %v468 = vsel %vm213, %v463, 0
    %470 = vmatprep.subr.mxu0 0.0
    %471 = vmatpush1.msra.mxu0 0.0
    %472 = vmatprep.subr.mxu0 0.0
    %473 = vmatpush1.msra.mxu0 0.0
    %474 = vmatprep.subr.mxu0 0.0
    %475 = vmatpush1.msra.mxu0 0.0
    %476 = vmatprep.subr.mxu0 0.0
    %477 = vmatpush1.msra.mxu0 0.0
    %478 = vmatprep.subr.mxu0 0.0
    %479 = vmatpush1.msra.mxu0 0.0
    %480 = vmatprep.subr.mxu0 0.0
    %481 = vmatpush1.msra.mxu0 0.0
    %482 = vmatprep.subr.mxu0 0.0
    %483 = vmatpush1.msra.mxu0 0.0
    %484 = vmatprep.subr.mxu0 0.0
    %485 = vmatpush1.msra.mxu0 0.0
    %486 = vmatprep.subr.mxu0 0.0
    %487 = vmatpush1.msra.mxu0 0.0
    %488 = vmatprep.subr.mxu0 0.0
    %489 = vmatpush1.msra.mxu0 0.0
    %490 = vmatprep.subr.mxu0 0.0
    %491 = vmatpush1.msra.mxu0 0.0
    %492 = vmatprep.subr.mxu0 0.0
    %493 = vmatpush1.msra.mxu0 0.0
    %494 = vmatprep.subr.mxu0 0.0
    %495 = vmatpush1.msra.mxu0 0.0
    %496 = vmatprep.subr.mxu0 0.0
    %497 = vmatpush1.msra.mxu0 0.0
    %498 = vmatprep.subr.mxu0 0.0
    %499 = vmatpush1.msra.mxu0 0.0
    %500 = vmatprep.subr.mxu0 0.0
    %501 = vmatpush1.msra.mxu0 %v465
    %502 = vmatprep.subr.mxu0 0.0
    %503 = vmatpush2.msra.mxu0 0.0
    %504 = vmatprep.subr.mxu0 0.0
    %505 = vmatpush2.msra.mxu0 0.0
    %506 = vmatprep.subr.mxu0 0.0
    %507 = vmatpush2.msra.mxu0 0.0
    %508 = vmatprep.subr.mxu0 0.0
    %509 = vmatpush2.msra.mxu0 0.0
    %510 = vmatprep.subr.mxu0 0.0
    %511 = vmatpush2.msra.mxu0 0.0
    %512 = vmatprep.subr.mxu0 0.0
    %513 = vmatpush2.msra.mxu0 0.0
    %514 = vmatprep.subr.mxu0 0.0
    %515 = vmatpush2.msra.mxu0 0.0
    %516 = vmatprep.subr.mxu0 0.0
    %517 = vmatpush2.msra.mxu0 0.0
    %518 = vmatprep.subr.mxu0 0.0
    %519 = vmatpush2.msra.mxu0 0.0
    %520 = vmatprep.subr.mxu0 0.0
    %521 = vmatpush2.msra.mxu0 0.0
    %522 = vmatprep.subr.mxu0 0.0
    %523 = vmatpush2.msra.mxu0 0.0
    %524 = vmatprep.subr.mxu0 0.0
    %525 = vmatpush2.msra.mxu0 0.0
    %526 = vmatprep.subr.mxu0 0.0
    %527 = vmatpush2.msra.mxu0 0.0
    %528 = vmatprep.subr.mxu0 0.0
    %529 = vmatpush2.msra.mxu0 0.0
    %530 = vmatprep.subr.mxu0 0.0
    %531 = vmatpush2.msra.mxu0 0.0
    %532 = vmatprep.subr.mxu0 0.0
    %533 = vmatpush2.msra.mxu0 0.0
    %534 = vmatprep.mubr.f32.mxu0 0.0
    %535 = vmatmul.mubr.f32.gmra.mxu0 %v468
    %v536 = vpop.f32.mrf.mxu0
    %v537 = vadd.f32 0.0, %v536
    %v538 = vpop.f32.mrf.mxu0
    %539 = vdwg.mxu0
    %540 = vrot.lane.b32.xlu0 %v207, 112
    %v541 = vpop.permute.xlu0 %540
    %542 = vrot.lane.b32.xlu0 %v207, 80
    %v543 = vpop.permute.xlu0 %542
    %v544 = vsel %vm213, %v541, 0
    %v546 = vsel %vm213, %v543, 0
    %548 = vmatprep.subr.mxu0 0.0
    %549 = vmatpush1.xpose.msra.mxu0 0.0
    %550 = vmatprep.subr.mxu0 0.0
    %551 = vmatpush1.xpose.msra.mxu0 0.0
    %552 = vmatprep.subr.mxu0 0.0
    %553 = vmatpush1.xpose.msra.mxu0 0.0
    %554 = vmatprep.subr.mxu0 0.0
    %555 = vmatpush1.xpose.msra.mxu0 0.0
    %556 = vmatprep.subr.mxu0 0.0
    %557 = vmatpush1.xpose.msra.mxu0 0.0
    %558 = vmatprep.subr.mxu0 0.0
    %559 = vmatpush1.xpose.msra.mxu0 0.0
    %560 = vmatprep.subr.mxu0 0.0
    %561 = vmatpush1.xpose.msra.mxu0 0.0
    %562 = vmatprep.subr.mxu0 0.0
    %563 = vmatpush1.xpose.msra.mxu0 0.0
    %564 = vmatprep.subr.mxu0 0.0
    %565 = vmatpush1.xpose.msra.mxu0 0.0
    %566 = vmatprep.subr.mxu0 0.0
    %567 = vmatpush1.xpose.msra.mxu0 0.0
    %568 = vmatprep.subr.mxu0 0.0
    %569 = vmatpush1.xpose.msra.mxu0 0.0
    %570 = vmatprep.subr.mxu0 0.0
    %571 = vmatpush1.xpose.msra.mxu0 0.0
    %572 = vmatprep.subr.mxu0 0.0
    %573 = vmatpush1.xpose.msra.mxu0 0.0
    %574 = vmatprep.subr.mxu0 0.0
    %575 = vmatpush1.xpose.msra.mxu0 0.0
    %576 = vmatprep.subr.mxu0 0.0
    %577 = vmatpush1.xpose.msra.mxu0 0.0
    %578 = vmatprep.subr.mxu0 0.0
    %579 = vmatpush1.xpose.msra.mxu0 %v546
    %580 = vmatprep.subr.mxu0 0.0
    %581 = vmatpush2.xpose.msra.mxu0 0.0
    %582 = vmatprep.subr.mxu0 0.0
    %583 = vmatpush2.xpose.msra.mxu0 0.0
    %584 = vmatprep.subr.mxu0 0.0
    %585 = vmatpush2.xpose.msra.mxu0 0.0
    %586 = vmatprep.subr.mxu0 0.0
    %587 = vmatpush2.xpose.msra.mxu0 0.0
    %588 = vmatprep.subr.mxu0 0.0
    %589 = vmatpush2.xpose.msra.mxu0 0.0
    %590 = vmatprep.subr.mxu0 0.0
    %591 = vmatpush2.xpose.msra.mxu0 0.0
    %592 = vmatprep.subr.mxu0 0.0
    %593 = vmatpush2.xpose.msra.mxu0 0.0
    %594 = vmatprep.subr.mxu0 0.0
    %595 = vmatpush2.xpose.msra.mxu0 0.0
    %596 = vmatprep.subr.mxu0 0.0
    %597 = vmatpush2.xpose.msra.mxu0 0.0
    %598 = vmatprep.subr.mxu0 0.0
    %599 = vmatpush2.xpose.msra.mxu0 0.0
    %600 = vmatprep.subr.mxu0 0.0
    %601 = vmatpush2.xpose.msra.mxu0 0.0
    %602 = vmatprep.subr.mxu0 0.0
    %603 = vmatpush2.xpose.msra.mxu0 0.0
    %604 = vmatprep.subr.mxu0 0.0
    %605 = vmatpush2.xpose.msra.mxu0 0.0
    %606 = vmatprep.subr.mxu0 0.0
    %607 = vmatpush2.xpose.msra.mxu0 0.0
    %608 = vmatprep.subr.mxu0 0.0
    %609 = vmatpush2.xpose.msra.mxu0 0.0
    %610 = vmatprep.subr.mxu0 0.0
    %611 = vmatpush2.xpose.msra.mxu0 0.0
    %612 = vmatprep.mubr.f32.mxu0 0.0
    %613 = vmatmul.mubr.f32.gmra.mxu0 %v544
    %v614 = vpop.f32.mrf.mxu0
    %v615 = vadd.f32 %v130, %v614
    %v616 = vpop.f32.mrf.mxu0
    %617 = vdwg.mxu0
    %v618 = vsel %vm213, %v615, -inf
    %619 = vmax.xlane.f32.xlu0 %v618
    %v620 = vpop.xlane.xlu0 %619
    %v621 = vsub.f32 %v615, %v620
    %v622 = vmul.f32 %v621, 1.442695
    %v623 = vpow.pop %v622
    %v624 = vsel %vm213, %v623, 0.0
    %625 = vadd.xlane.f32.xlu0 %v624
    %v626 = vpop.xlane.xlu0 %625
    %v627 = vrcp.pop %v626
    %v628 = vmul.f32 %v623, %v627
    %629 = vrot.lane.b32.xlu0 %v207, 48
    %v630 = vpop.permute.xlu0 %629
    %v633 = vsel %vm213, %v628, 0
    %635 = vmatprep.subr.mxu0 0.0
    %636 = vmatpush1.msra.mxu0 0.0
    %637 = vmatprep.subr.mxu0 0.0
    %638 = vmatpush1.msra.mxu0 0.0
    %639 = vmatprep.subr.mxu0 0.0
    %640 = vmatpush1.msra.mxu0 0.0
    %641 = vmatprep.subr.mxu0 0.0
    %642 = vmatpush1.msra.mxu0 0.0
    %643 = vmatprep.subr.mxu0 0.0
    %644 = vmatpush1.msra.mxu0 0.0
    %645 = vmatprep.subr.mxu0 0.0
    %646 = vmatpush1.msra.mxu0 0.0
    %647 = vmatprep.subr.mxu0 0.0
    %648 = vmatpush1.msra.mxu0 0.0
    %649 = vmatprep.subr.mxu0 0.0
    %650 = vmatpush1.msra.mxu0 0.0
    %651 = vmatprep.subr.mxu0 0.0
    %652 = vmatpush1.msra.mxu0 0.0
    %653 = vmatprep.subr.mxu0 0.0
    %654 = vmatpush1.msra.mxu0 0.0
    %655 = vmatprep.subr.mxu0 0.0
    %656 = vmatpush1.msra.mxu0 0.0
    %657 = vmatprep.subr.mxu0 0.0
    %658 = vmatpush1.msra.mxu0 0.0
    %659 = vmatprep.subr.mxu0 0.0
    %660 = vmatpush1.msra.mxu0 0.0
    %661 = vmatprep.subr.mxu0 0.0
    %662 = vmatpush1.msra.mxu0 0.0
    %663 = vmatprep.subr.mxu0 0.0
    %664 = vmatpush1.msra.mxu0 0.0
    %665 = vmatprep.subr.mxu0 0.0
    %666 = vmatpush1.msra.mxu0 %v630
    %667 = vmatprep.subr.mxu0 0.0
    %668 = vmatpush2.msra.mxu0 0.0
    %669 = vmatprep.subr.mxu0 0.0
    %670 = vmatpush2.msra.mxu0 0.0
    %671 = vmatprep.subr.mxu0 0.0
    %672 = vmatpush2.msra.mxu0 0.0
    %673 = vmatprep.subr.mxu0 0.0
    %674 = vmatpush2.msra.mxu0 0.0
    %675 = vmatprep.subr.mxu0 0.0
    %676 = vmatpush2.msra.mxu0 0.0
    %677 = vmatprep.subr.mxu0 0.0
    %678 = vmatpush2.msra.mxu0 0.0
    %679 = vmatprep.subr.mxu0 0.0
    %680 = vmatpush2.msra.mxu0 0.0
    %681 = vmatprep.subr.mxu0 0.0
    %682 = vmatpush2.msra.mxu0 0.0
    %683 = vmatprep.subr.mxu0 0.0
    %684 = vmatpush2.msra.mxu0 0.0
    %685 = vmatprep.subr.mxu0 0.0
    %686 = vmatpush2.msra.mxu0 0.0
    %687 = vmatprep.subr.mxu0 0.0
    %688 = vmatpush2.msra.mxu0 0.0
    %689 = vmatprep.subr.mxu0 0.0
    %690 = vmatpush2.msra.mxu0 0.0
    %691 = vmatprep.subr.mxu0 0.0
    %692 = vmatpush2.msra.mxu0 0.0
    %693 = vmatprep.subr.mxu0 0.0
    %694 = vmatpush2.msra.mxu0 0.0
    %695 = vmatprep.subr.mxu0 0.0
    %696 = vmatpush2.msra.mxu0 0.0
    %697 = vmatprep.subr.mxu0 0.0
    %698 = vmatpush2.msra.mxu0 0.0
    %699 = vmatprep.mubr.f32.mxu0 0.0
    %700 = vmatmul.mubr.f32.gmra.mxu0 %v633
    %v701 = vpop.f32.mrf.mxu0
    %v702 = vadd.f32 0.0, %v701
    %v703 = vpop.f32.mrf.mxu0
    %704 = vdwg.mxu0
    %705 = vrot.lane.b32.xlu0 %v207, 104
    %v706 = vpop.permute.xlu0 %705
    %707 = vrot.lane.b32.xlu0 %v207, 72
    %v708 = vpop.permute.xlu0 %707
    %v709 = vsel %vm213, %v706, 0
    %v711 = vsel %vm213, %v708, 0
    %713 = vmatprep.subr.mxu0 0.0
    %714 = vmatpush1.xpose.msra.mxu0 0.0
    %715 = vmatprep.subr.mxu0 0.0
    %716 = vmatpush1.xpose.msra.mxu0 0.0
    %717 = vmatprep.subr.mxu0 0.0
    %718 = vmatpush1.xpose.msra.mxu0 0.0
    %719 = vmatprep.subr.mxu0 0.0
    %720 = vmatpush1.xpose.msra.mxu0 0.0
    %721 = vmatprep.subr.mxu0 0.0
    %722 = vmatpush1.xpose.msra.mxu0 0.0
    %723 = vmatprep.subr.mxu0 0.0
    %724 = vmatpush1.xpose.msra.mxu0 0.0
    %725 = vmatprep.subr.mxu0 0.0
    %726 = vmatpush1.xpose.msra.mxu0 0.0
    %727 = vmatprep.subr.mxu0 0.0
    %728 = vmatpush1.xpose.msra.mxu0 0.0
    %729 = vmatprep.subr.mxu0 0.0
    %730 = vmatpush1.xpose.msra.mxu0 0.0
    %731 = vmatprep.subr.mxu0 0.0
    %732 = vmatpush1.xpose.msra.mxu0 0.0
    %733 = vmatprep.subr.mxu0 0.0
    %734 = vmatpush1.xpose.msra.mxu0 0.0
    %735 = vmatprep.subr.mxu0 0.0
    %736 = vmatpush1.xpose.msra.mxu0 0.0
    %737 = vmatprep.subr.mxu0 0.0
    %738 = vmatpush1.xpose.msra.mxu0 0.0
    %739 = vmatprep.subr.mxu0 0.0
    %740 = vmatpush1.xpose.msra.mxu0 0.0
    %741 = vmatprep.subr.mxu0 0.0
    %742 = vmatpush1.xpose.msra.mxu0 0.0
    %743 = vmatprep.subr.mxu0 0.0
    %744 = vmatpush1.xpose.msra.mxu0 %v711
    %745 = vmatprep.subr.mxu0 0.0
    %746 = vmatpush2.xpose.msra.mxu0 0.0
    %747 = vmatprep.subr.mxu0 0.0
    %748 = vmatpush2.xpose.msra.mxu0 0.0
    %749 = vmatprep.subr.mxu0 0.0
    %750 = vmatpush2.xpose.msra.mxu0 0.0
    %751 = vmatprep.subr.mxu0 0.0
    %752 = vmatpush2.xpose.msra.mxu0 0.0
    %753 = vmatprep.subr.mxu0 0.0
    %754 = vmatpush2.xpose.msra.mxu0 0.0
    %755 = vmatprep.subr.mxu0 0.0
    %756 = vmatpush2.xpose.msra.mxu0 0.0
    %757 = vmatprep.subr.mxu0 0.0
    %758 = vmatpush2.xpose.msra.mxu0 0.0
    %759 = vmatprep.subr.mxu0 0.0
    %760 = vmatpush2.xpose.msra.mxu0 0.0
    %761 = vmatprep.subr.mxu0 0.0
    %762 = vmatpush2.xpose.msra.mxu0 0.0
    %763 = vmatprep.subr.mxu0 0.0
    %764 = vmatpush2.xpose.msra.mxu0 0.0
    %765 = vmatprep.subr.mxu0 0.0
    %766 = vmatpush2.xpose.msra.mxu0 0.0
    %767 = vmatprep.subr.mxu0 0.0
    %768 = vmatpush2.xpose.msra.mxu0 0.0
    %769 = vmatprep.subr.mxu0 0.0
    %770 = vmatpush2.xpose.msra.mxu0 0.0
    %771 = vmatprep.subr.mxu0 0.0
    %772 = vmatpush2.xpose.msra.mxu0 0.0
    %773 = vmatprep.subr.mxu0 0.0
    %774 = vmatpush2.xpose.msra.mxu0 0.0
    %775 = vmatprep.subr.mxu0 0.0
    %776 = vmatpush2.xpose.msra.mxu0 0.0
    %777 = vmatprep.mubr.f32.mxu0 0.0
    %778 = vmatmul.mubr.f32.gmra.mxu0 %v709
    %v779 = vpop.f32.mrf.mxu0
    %v780 = vadd.f32 %v130, %v779
    %v781 = vpop.f32.mrf.mxu0
    %782 = vdwg.mxu0
    %v783 = vsel %vm213, %v780, -inf
    %784 = vmax.xlane.f32.xlu0 %v783
    %v785 = vpop.xlane.xlu0 %784
    %v786 = vsub.f32 %v780, %v785
    %v787 = vmul.f32 %v786, 1.442695
    %v788 = vpow.pop %v787
    %v789 = vsel %vm213, %v788, 0.0
    %790 = vadd.xlane.f32.xlu0 %v789
    %v791 = vpop.xlane.xlu0 %790
    %v792 = vrcp.pop %v791
    %v793 = vmul.f32 %v788, %v792
    %794 = vrot.lane.b32.xlu0 %v207, 40
    %v795 = vpop.permute.xlu0 %794
    %v798 = vsel %vm213, %v793, 0
    %800 = vmatprep.subr.mxu0 0.0
    %801 = vmatpush1.msra.mxu0 0.0
    %802 = vmatprep.subr.mxu0 0.0
    %803 = vmatpush1.msra.mxu0 0.0
    %804 = vmatprep.subr.mxu0 0.0
    %805 = vmatpush1.msra.mxu0 0.0
    %806 = vmatprep.subr.mxu0 0.0
    %807 = vmatpush1.msra.mxu0 0.0
    %808 = vmatprep.subr.mxu0 0.0
    %809 = vmatpush1.msra.mxu0 0.0
    %810 = vmatprep.subr.mxu0 0.0
    %811 = vmatpush1.msra.mxu0 0.0
    %812 = vmatprep.subr.mxu0 0.0
    %813 = vmatpush1.msra.mxu0 0.0
    %814 = vmatprep.subr.mxu0 0.0
    %815 = vmatpush1.msra.mxu0 0.0
    %816 = vmatprep.subr.mxu0 0.0
    %817 = vmatpush1.msra.mxu0 0.0
    %818 = vmatprep.subr.mxu0 0.0
    %819 = vmatpush1.msra.mxu0 0.0
    %820 = vmatprep.subr.mxu0 0.0
    %821 = vmatpush1.msra.mxu0 0.0
    %822 = vmatprep.subr.mxu0 0.0
    %823 = vmatpush1.msra.mxu0 0.0
    %824 = vmatprep.subr.mxu0 0.0
    %825 = vmatpush1.msra.mxu0 0.0
    %826 = vmatprep.subr.mxu0 0.0
    %827 = vmatpush1.msra.mxu0 0.0
    %828 = vmatprep.subr.mxu0 0.0
    %829 = vmatpush1.msra.mxu0 0.0
    %830 = vmatprep.subr.mxu0 0.0
    %831 = vmatpush1.msra.mxu0 %v795
    %832 = vmatprep.subr.mxu0 0.0
    %833 = vmatpush2.msra.mxu0 0.0
    %834 = vmatprep.subr.mxu0 0.0
    %835 = vmatpush2.msra.mxu0 0.0
    %836 = vmatprep.subr.mxu0 0.0
    %837 = vmatpush2.msra.mxu0 0.0
    %838 = vmatprep.subr.mxu0 0.0
    %839 = vmatpush2.msra.mxu0 0.0
    %840 = vmatprep.subr.mxu0 0.0
    %841 = vmatpush2.msra.mxu0 0.0
    %842 = vmatprep.subr.mxu0 0.0
    %843 = vmatpush2.msra.mxu0 0.0
    %844 = vmatprep.subr.mxu0 0.0
    %845 = vmatpush2.msra.mxu0 0.0
    %846 = vmatprep.subr.mxu0 0.0
    %847 = vmatpush2.msra.mxu0 0.0
    %848 = vmatprep.subr.mxu0 0.0
    %849 = vmatpush2.msra.mxu0 0.0
    %850 = vmatprep.subr.mxu0 0.0
    %851 = vmatpush2.msra.mxu0 0.0
    %852 = vmatprep.subr.mxu0 0.0
    %853 = vmatpush2.msra.mxu0 0.0
    %854 = vmatprep.subr.mxu0 0.0
    %855 = vmatpush2.msra.mxu0 0.0
    %856 = vmatprep.subr.mxu0 0.0
    %857 = vmatpush2.msra.mxu0 0.0
    %858 = vmatprep.subr.mxu0 0.0
    %859 = vmatpush2.msra.mxu0 0.0
    %860 = vmatprep.subr.mxu0 0.0
    %861 = vmatpush2.msra.mxu0 0.0
    %862 = vmatprep.subr.mxu0 0.0
    %863 = vmatpush2.msra.mxu0 0.0
    %864 = vmatprep.mubr.f32.mxu0 0.0
    %865 = vmatmul.mubr.f32.gmra.mxu0 %v798
    %v866 = vpop.f32.mrf.mxu0
    %v867 = vadd.f32 0.0, %v866
    %v868 = vpop.f32.mrf.mxu0
    %869 = vdwg.mxu0
    %871 = vrot.lane.b32.xlu0 %v537, 8
    %v872 = vpop.permute.xlu0 %871
    %875 = vrot.lane.b32.xlu0 %v702, 16
    %v876 = vpop.permute.xlu0 %875
    %879 = vrot.lane.b32.xlu0 %v867, 24
    %v880 = vpop.permute.xlu0 %879
    %v882 = vsel %vm213, %v372, %v872
    %vm883 = vcmask 130048
    %v884 = vsel %vm883, %v882, %v876
    %vm885 = vcmask 195584
    %v886 = vsel %vm885, %v884, %v880
    %v887 = vld [vmem:[%s1 + $0x108] sm:$0xff]
    %v888 = vld [vmem:[%s1 + $0x110] sm:$0xff]
    %v889 = vld [vmem:[%s1 + $0x118] sm:$0xff]
    %v890 = vld [vmem:[%s1 + $0x120] sm:$0xff]
    %v891 = vld [vmem:[%s1 + $0x1a8] sm:$0xff]
    %v893 = vsel %vm136, %v886, 0
    %895 = vmatprep.subr.mxu0 0.0
    %896 = vmatpush1.msra.mxu0 0.0
    %897 = vmatprep.subr.mxu0 0.0
    %898 = vmatpush1.msra.mxu0 0.0
    %899 = vmatprep.subr.mxu0 0.0
    %900 = vmatpush1.msra.mxu0 0.0
    %901 = vmatprep.subr.mxu0 0.0
    %902 = vmatpush1.msra.mxu0 0.0
    %903 = vmatprep.subr.mxu0 0.0
    %904 = vmatpush1.msra.mxu0 0.0
    %905 = vmatprep.subr.mxu0 0.0
    %906 = vmatpush1.msra.mxu0 0.0
    %907 = vmatprep.subr.mxu0 0.0
    %908 = vmatpush1.msra.mxu0 0.0
    %909 = vmatprep.subr.mxu0 0.0
    %910 = vmatpush1.msra.mxu0 0.0
    %911 = vmatprep.subr.mxu0 0.0
    %912 = vmatpush1.msra.mxu0 0.0
    %913 = vmatprep.subr.mxu0 0.0
    %914 = vmatpush1.msra.mxu0 0.0
    %915 = vmatprep.subr.mxu0 0.0
    %916 = vmatpush1.msra.mxu0 0.0
    %917 = vmatprep.subr.mxu0 0.0
    %918 = vmatpush1.msra.mxu0 0.0
    %919 = vmatprep.subr.mxu0 0.0
    %920 = vmatpush1.msra.mxu0 %v890
    %921 = vmatprep.subr.mxu0 0.0
    %922 = vmatpush1.msra.mxu0 %v889
    %923 = vmatprep.subr.mxu0 0.0
    %924 = vmatpush1.msra.mxu0 %v888
    %925 = vmatprep.subr.mxu0 0.0
    %926 = vmatpush1.msra.mxu0 %v887
    %927 = vmatprep.subr.mxu0 0.0
    %928 = vmatpush2.msra.mxu0 0.0
    %929 = vmatprep.subr.mxu0 0.0
    %930 = vmatpush2.msra.mxu0 0.0
    %931 = vmatprep.subr.mxu0 0.0
    %932 = vmatpush2.msra.mxu0 0.0
    %933 = vmatprep.subr.mxu0 0.0
    %934 = vmatpush2.msra.mxu0 0.0
    %935 = vmatprep.subr.mxu0 0.0
    %936 = vmatpush2.msra.mxu0 0.0
    %937 = vmatprep.subr.mxu0 0.0
    %938 = vmatpush2.msra.mxu0 0.0
    %939 = vmatprep.subr.mxu0 0.0
    %940 = vmatpush2.msra.mxu0 0.0
    %941 = vmatprep.subr.mxu0 0.0
    %942 = vmatpush2.msra.mxu0 0.0
    %943 = vmatprep.subr.mxu0 0.0
    %944 = vmatpush2.msra.mxu0 0.0
    %945 = vmatprep.subr.mxu0 0.0
    %946 = vmatpush2.msra.mxu0 0.0
    %947 = vmatprep.subr.mxu0 0.0
    %948 = vmatpush2.msra.mxu0 0.0
    %949 = vmatprep.subr.mxu0 0.0
    %950 = vmatpush2.msra.mxu0 0.0
    %951 = vmatprep.subr.mxu0 0.0
    %952 = vmatpush2.msra.mxu0 0.0
    %953 = vmatprep.subr.mxu0 0.0
    %954 = vmatpush2.msra.mxu0 0.0
    %955 = vmatprep.subr.mxu0 0.0
    %956 = vmatpush2.msra.mxu0 0.0
    %957 = vmatprep.subr.mxu0 0.0
    %958 = vmatpush2.msra.mxu0 0.0
    %959 = vmatprep.mubr.f32.mxu0 0.0
    %960 = vmatmul.mubr.f32.gmra.mxu0 %v893
    %v961 = vpop.f32.mrf.mxu0
    %v962 = vadd.f32 %v891, %v961
    %v963 = vpop.f32.mrf.mxu0
    %964 = vdwg.mxu0
    %v965 = vld [vmem:[%s1 + $0x1b0] sm:$0xff]
    %v966 = vld [vmem:[%s1 + $0x1b8] sm:$0xff]
    %v967 = vadd.f32 %v120, %v962
    %v968 = vsel %vm136, %v967, 0.0
    %969 = vadd.xlane.f32.xlu0 %v968
    %v970 = vpop.xlane.xlu0 %969
    %v971 = vrcp.pop 32.0
    %v972 = vmul.f32 %v970, %v971
    %v973 = vsub.f32 %v967, %v972
    %v974 = vmul.f32 %v973, %v973
    %v975 = vsel %vm136, %v974, 0.0
    %976 = vadd.xlane.f32.xlu0 %v975
    %v977 = vpop.xlane.xlu0 %976
    %v978 = vmul.f32 %v977, %v971
    %v979 = vadd.f32 %v978, 1e-05
    %v980 = vrsqrt.pop %v979
    %v981 = vmul.f32 %v973, %v980
    %v982 = vmul.f32 %v981, %v965
    %v983 = vadd.f32 %v982, %v966
    %v984 = vld [vmem:[%s3] sm:$0xff]
    %v985 = vld [vmem:[%s3 + $0x8] sm:$0xff]
    %v986 = vld [vmem:[%s3 + $0x10] sm:$0xff]
    %v987 = vld [vmem:[%s3 + $0x18] sm:$0xff]
    %v988 = vld [vmem:[%s3 + $0x20] sm:$0xff]
    %v989 = vld [vmem:[%s1 + $0x128] sm:$0xff]
    %v990 = vld [vmem:[%s1 + $0x130] sm:$0xff]
    %v991 = vld [vmem:[%s1 + $0x138] sm:$0xff]
    %v992 = vld [vmem:[%s1 + $0x140] sm:$0xff]
    %v993 = vld [vmem:[%s1 + $0x148] sm:$0xff]
    %v994 = vld [vmem:[%s1 + $0x150] sm:$0xff]
    %v995 = vld [vmem:[%s1 + $0x158] sm:$0xff]
    %v996 = vld [vmem:[%s1 + $0x160] sm:$0xff]
    %v997 = vld [vmem:[%s1 + $0x168] sm:$0xff]
    %v998 = vld [vmem:[%s1 + $0x170] sm:$0xff]
    %v999 = vld [vmem:[%s1 + $0x178] sm:$0xff]
    %v1000 = vld [vmem:[%s1 + $0x180] sm:$0xff]
    %v1001 = vld [vmem:[%s1 + $0x188] sm:$0xff]
    %v1002 = vld [vmem:[%s1 + $0x190] sm:$0xff]
    %v1003 = vld [vmem:[%s1 + $0x198] sm:$0xff]
    %v1004 = vld [vmem:[%s1 + $0x1a0] sm:$0xff]
    %v1005 = vld [vmem:[%s1 + $0x1d0] sm:$0xff]
    %v1007 = vsel %vm136, %v983, 0
    %1009 = vmatprep.subr.mxu0 0.0
    %1010 = vmatpush1.msra.mxu0 0.0
    %1011 = vmatprep.subr.mxu0 0.0
    %1012 = vmatpush1.msra.mxu0 0.0
    %1013 = vmatprep.subr.mxu0 0.0
    %1014 = vmatpush1.msra.mxu0 0.0
    %1015 = vmatprep.subr.mxu0 0.0
    %1016 = vmatpush1.msra.mxu0 0.0
    %1017 = vmatprep.subr.mxu0 0.0
    %1018 = vmatpush1.msra.mxu0 0.0
    %1019 = vmatprep.subr.mxu0 0.0
    %1020 = vmatpush1.msra.mxu0 0.0
    %1021 = vmatprep.subr.mxu0 0.0
    %1022 = vmatpush1.msra.mxu0 0.0
    %1023 = vmatprep.subr.mxu0 0.0
    %1024 = vmatpush1.msra.mxu0 0.0
    %1025 = vmatprep.subr.mxu0 0.0
    %1026 = vmatpush1.msra.mxu0 0.0
    %1027 = vmatprep.subr.mxu0 0.0
    %1028 = vmatpush1.msra.mxu0 0.0
    %1029 = vmatprep.subr.mxu0 0.0
    %1030 = vmatpush1.msra.mxu0 0.0
    %1031 = vmatprep.subr.mxu0 0.0
    %1032 = vmatpush1.msra.mxu0 0.0
    %1033 = vmatprep.subr.mxu0 0.0
    %1034 = vmatpush1.msra.mxu0 %v987
    %1035 = vmatprep.subr.mxu0 0.0
    %1036 = vmatpush1.msra.mxu0 %v986
    %1037 = vmatprep.subr.mxu0 0.0
    %1038 = vmatpush1.msra.mxu0 %v985
    %1039 = vmatprep.subr.mxu0 0.0
    %1040 = vmatpush1.msra.mxu0 %v984
    %1041 = vmatprep.subr.mxu0 0.0
    %1042 = vmatpush2.msra.mxu0 0.0
    %1043 = vmatprep.subr.mxu0 0.0
    %1044 = vmatpush2.msra.mxu0 0.0
    %1045 = vmatprep.subr.mxu0 0.0
    %1046 = vmatpush2.msra.mxu0 0.0
    %1047 = vmatprep.subr.mxu0 0.0
    %1048 = vmatpush2.msra.mxu0 0.0
    %1049 = vmatprep.subr.mxu0 0.0
    %1050 = vmatpush2.msra.mxu0 0.0
    %1051 = vmatprep.subr.mxu0 0.0
    %1052 = vmatpush2.msra.mxu0 0.0
    %1053 = vmatprep.subr.mxu0 0.0
    %1054 = vmatpush2.msra.mxu0 0.0
    %1055 = vmatprep.subr.mxu0 0.0
    %1056 = vmatpush2.msra.mxu0 0.0
    %1057 = vmatprep.subr.mxu0 0.0
    %1058 = vmatpush2.msra.mxu0 0.0
    %1059 = vmatprep.subr.mxu0 0.0
    %1060 = vmatpush2.msra.mxu0 0.0
    %1061 = vmatprep.subr.mxu0 0.0
    %1062 = vmatpush2.msra.mxu0 0.0
    %1063 = vmatprep.subr.mxu0 0.0
    %1064 = vmatpush2.msra.mxu0 0.0
    %1065 = vmatprep.subr.mxu0 0.0
    %1066 = vmatpush2.msra.mxu0 0.0
    %1067 = vmatprep.subr.mxu0 0.0
    %1068 = vmatpush2.msra.mxu0 0.0
    %1069 = vmatprep.subr.mxu0 0.0
    %1070 = vmatpush2.msra.mxu0 0.0
    %1071 = vmatprep.subr.mxu0 0.0
    %1072 = vmatpush2.msra.mxu0 0.0
    %1073 = vmatprep.mubr.f32.mxu0 0.0
    %1074 = vmatmul.mubr.f32.gmra.mxu0 %v1007
    %v1075 = vpop.f32.mrf.mxu0
    %v1076 = vadd.f32 %v988, %v1075
    %v1077 = vpop.f32.mrf.mxu0
    %1078 = vdwg.mxu0
    %v1079 = vmax.f32 %v1076, 0.0
    %1080 = vmatprep.subr.mxu0 0.0
    %1081 = vmatpush1.msra.mxu0 %v1004
    %1082 = vmatprep.subr.mxu0 0.0
    %1083 = vmatpush1.msra.mxu0 %v1003
    %1084 = vmatprep.subr.mxu0 0.0
    %1085 = vmatpush1.msra.mxu0 %v1002
    %1086 = vmatprep.subr.mxu0 0.0
    %1087 = vmatpush1.msra.mxu0 %v1001
    %1088 = vmatprep.subr.mxu0 0.0
    %1089 = vmatpush1.msra.mxu0 %v1000
    %1090 = vmatprep.subr.mxu0 0.0
    %1091 = vmatpush1.msra.mxu0 %v999
    %1092 = vmatprep.subr.mxu0 0.0
    %1093 = vmatpush1.msra.mxu0 %v998
    %1094 = vmatprep.subr.mxu0 0.0
    %1095 = vmatpush1.msra.mxu0 %v997
    %1096 = vmatprep.subr.mxu0 0.0
    %1097 = vmatpush1.msra.mxu0 %v996
    %1098 = vmatprep.subr.mxu0 0.0
    %1099 = vmatpush1.msra.mxu0 %v995
    %1100 = vmatprep.subr.mxu0 0.0
    %1101 = vmatpush1.msra.mxu0 %v994
    %1102 = vmatprep.subr.mxu0 0.0
    %1103 = vmatpush1.msra.mxu0 %v993
    %1104 = vmatprep.subr.mxu0 0.0
    %1105 = vmatpush1.msra.mxu0 %v992
    %1106 = vmatprep.subr.mxu0 0.0
    %1107 = vmatpush1.msra.mxu0 %v991
    %1108 = vmatprep.subr.mxu0 0.0
    %1109 = vmatpush1.msra.mxu0 %v990
    %1110 = vmatprep.subr.mxu0 0.0
    %1111 = vmatpush1.msra.mxu0 %v989
    %1112 = vmatprep.subr.mxu0 0.0
    %1113 = vmatpush2.msra.mxu0 0.0
    %1114 = vmatprep.subr.mxu0 0.0
    %1115 = vmatpush2.msra.mxu0 0.0
    %1116 = vmatprep.subr.mxu0 0.0
    %1117 = vmatpush2.msra.mxu0 0.0
    %1118 = vmatprep.subr.mxu0 0.0
    %1119 = vmatpush2.msra.mxu0 0.0
    %1120 = vmatprep.subr.mxu0 0.0
    %1121 = vmatpush2.msra.mxu0 0.0
    %1122 = vmatprep.subr.mxu0 0.0
    %1123 = vmatpush2.msra.mxu0 0.0
    %1124 = vmatprep.subr.mxu0 0.0
    %1125 = vmatpush2.msra.mxu0 0.0
    %1126 = vmatprep.subr.mxu0 0.0
    %1127 = vmatpush2.msra.mxu0 0.0
    %1128 = vmatprep.subr.mxu0 0.0
    %1129 = vmatpush2.msra.mxu0 0.0
    %1130 = vmatprep.subr.mxu0 0.0
    %1131 = vmatpush2.msra.mxu0 0.0
    %1132 = vmatprep.subr.mxu0 0.0
    %1133 = vmatpush2.msra.mxu0 0.0
    %1134 = vmatprep.subr.mxu0 0.0
    %1135 = vmatpush2.msra.mxu0 0.0
    %1136 = vmatprep.subr.mxu0 0.0
    %1137 = vmatpush2.msra.mxu0 0.0
    %1138 = vmatprep.subr.mxu0 0.0
    %1139 = vmatpush2.msra.mxu0 0.0
    %1140 = vmatprep.subr.mxu0 0.0
    %1141 = vmatpush2.msra.mxu0 0.0
    %1142 = vmatprep.subr.mxu0 0.0
    %1143 = vmatpush2.msra.mxu0 0.0
    %1144 = vmatprep.mubr.f32.mxu0 0.0
    %1145 = vmatmul.mubr.f32.gmra.mxu0 %v1079
    %v1146 = vpop.f32.mrf.mxu0
    %v1147 = vadd.f32 %v1005, %v1146
    %v1148 = vpop.f32.mrf.mxu0
    %1149 = vdwg.mxu0
    %v1150 = vld [vmem:[%s1 + $0x1c0] sm:$0xff]
    %v1151 = vld [vmem:[%s1 + $0x1c8] sm:$0xff]
    %v1152 = vadd.f32 %v983, %v1147
    %v1153 = vsel %vm136, %v1152, 0.0
    %1154 = vadd.xlane.f32.xlu0 %v1153
    %v1155 = vpop.xlane.xlu0 %1154
    %v1156 = vmul.f32 %v1155, %v971
    %v1157 = vsub.f32 %v1152, %v1156
    %v1158 = vmul.f32 %v1157, %v1157
    %v1159 = vsel %vm136, %v1158, 0.0
    %1160 = vadd.xlane.f32.xlu0 %v1159
    %v1161 = vpop.xlane.xlu0 %1160
    %v1162 = vmul.f32 %v1161, %v971
    %v1163 = vadd.f32 %v1162, 1e-05
    %v1164 = vrsqrt.pop %v1163
    %v1165 = vmul.f32 %v1157, %v1164
    %v1166 = vmul.f32 %v1165, %v1150
    %v1167 = vadd.f32 %v1166, %v1151
    %v1168 = vld [vmem:[%s2 + $0x28] sm:$0xff]
    %v1169 = vld [vmem:[%s2 + $0x30] sm:$0xff]
    %v1170 = vld [vmem:[%s2 + $0x38] sm:$0xff]
    %v1171 = vld [vmem:[%s2 + $0x40] sm:$0xff]
    %v1172 = vld [vmem:[%s2 + $0x48] sm:$0xff]
    %v1174 = vsel %vm136, %v1167, 0
    %1176 = vmatprep.subr.mxu0 0.0
    %1177 = vmatpush1.msra.mxu0 0.0
    %1178 = vmatprep.subr.mxu0 0.0
    %1179 = vmatpush1.msra.mxu0 0.0
    %1180 = vmatprep.subr.mxu0 0.0
    %1181 = vmatpush1.msra.mxu0 0.0
    %1182 = vmatprep.subr.mxu0 0.0
    %1183 = vmatpush1.msra.mxu0 0.0
    %1184 = vmatprep.subr.mxu0 0.0
    %1185 = vmatpush1.msra.mxu0 0.0
    %1186 = vmatprep.subr.mxu0 0.0
    %1187 = vmatpush1.msra.mxu0 0.0
    %1188 = vmatprep.subr.mxu0 0.0
    %1189 = vmatpush1.msra.mxu0 0.0
    %1190 = vmatprep.subr.mxu0 0.0
    %1191 = vmatpush1.msra.mxu0 0.0
    %1192 = vmatprep.subr.mxu0 0.0
    %1193 = vmatpush1.msra.mxu0 0.0
    %1194 = vmatprep.subr.mxu0 0.0
    %1195 = vmatpush1.msra.mxu0 0.0
    %1196 = vmatprep.subr.mxu0 0.0
    %1197 = vmatpush1.msra.mxu0 0.0
    %1198 = vmatprep.subr.mxu0 0.0
    %1199 = vmatpush1.msra.mxu0 0.0
    %1200 = vmatprep.subr.mxu0 0.0
    %1201 = vmatpush1.msra.mxu0 %v1171
    %1202 = vmatprep.subr.mxu0 0.0
    %1203 = vmatpush1.msra.mxu0 %v1170
    %1204 = vmatprep.subr.mxu0 0.0
    %1205 = vmatpush1.msra.mxu0 %v1169
    %1206 = vmatprep.subr.mxu0 0.0
    %1207 = vmatpush1.msra.mxu0 %v1168
    %1208 = vmatprep.subr.mxu0 0.0
    %1209 = vmatpush2.msra.mxu0 0.0
    %1210 = vmatprep.subr.mxu0 0.0
    %1211 = vmatpush2.msra.mxu0 0.0
    %1212 = vmatprep.subr.mxu0 0.0
    %1213 = vmatpush2.msra.mxu0 0.0
    %1214 = vmatprep.subr.mxu0 0.0
    %1215 = vmatpush2.msra.mxu0 0.0
    %1216 = vmatprep.subr.mxu0 0.0
    %1217 = vmatpush2.msra.mxu0 0.0
    %1218 = vmatprep.subr.mxu0 0.0
    %1219 = vmatpush2.msra.mxu0 0.0
    %1220 = vmatprep.subr.mxu0 0.0
    %1221 = vmatpush2.msra.mxu0 0.0
    %1222 = vmatprep.subr.mxu0 0.0
    %1223 = vmatpush2.msra.mxu0 0.0
    %1224 = vmatprep.subr.mxu0 0.0
    %1225 = vmatpush2.msra.mxu0 0.0
    %1226 = vmatprep.subr.mxu0 0.0
    %1227 = vmatpush2.msra.mxu0 0.0
    %1228 = vmatprep.subr.mxu0 0.0
    %1229 = vmatpush2.msra.mxu0 0.0
    %1230 = vmatprep.subr.mxu0 0.0
    %1231 = vmatpush2.msra.mxu0 0.0
    %1232 = vmatprep.subr.mxu0 0.0
    %1233 = vmatpush2.msra.mxu0 0.0
    %1234 = vmatprep.subr.mxu0 0.0
    %1235 = vmatpush2.msra.mxu0 0.0
    %1236 = vmatprep.subr.mxu0 0.0
    %1237 = vmatpush2.msra.mxu0 0.0
    %1238 = vmatprep.subr.mxu0 0.0
    %1239 = vmatpush2.msra.mxu0 0.0
    %1240 = vmatprep.mubr.f32.mxu0 0.0
    %1241 = vmatmul.mubr.f32.gmra.mxu0 %v1174
    %v1242 = vpop.f32.mrf.mxu0
    %v1243 = vadd.f32 %v1172, %v1242
    %v1244 = vpop.f32.mrf.mxu0
    %1245 = vdwg.mxu0
    %1247 = vrot.lane.b32.xlu0 %v1243, 96
    %v1248 = vpop.permute.xlu0 %1247
    %v1249 = vsel %vm213, %v1243, 0
    %v1251 = vsel %vm213, %v1248, 0
    %1253 = vmatprep.subr.mxu0 0.0
    %1254 = vmatpush1.xpose.msra.mxu0 0.0
    %1255 = vmatprep.subr.mxu0 0.0
    %1256 = vmatpush1.xpose.msra.mxu0 0.0
    %1257 = vmatprep.subr.mxu0 0.0
    %1258 = vmatpush1.xpose.msra.mxu0 0.0
    %1259 = vmatprep.subr.mxu0 0.0
    %1260 = vmatpush1.xpose.msra.mxu0 0.0
    %1261 = vmatprep.subr.mxu0 0.0
    %1262 = vmatpush1.xpose.msra.mxu0 0.0
    %1263 = vmatprep.subr.mxu0 0.0
    %1264 = vmatpush1.xpose.msra.mxu0 0.0
    %1265 = vmatprep.subr.mxu0 0.0
    %1266 = vmatpush1.xpose.msra.mxu0 0.0
    %1267 = vmatprep.subr.mxu0 0.0
    %1268 = vmatpush1.xpose.msra.mxu0 0.0
    %1269 = vmatprep.subr.mxu0 0.0
    %1270 = vmatpush1.xpose.msra.mxu0 0.0
    %1271 = vmatprep.subr.mxu0 0.0
    %1272 = vmatpush1.xpose.msra.mxu0 0.0
    %1273 = vmatprep.subr.mxu0 0.0
    %1274 = vmatpush1.xpose.msra.mxu0 0.0
    %1275 = vmatprep.subr.mxu0 0.0
    %1276 = vmatpush1.xpose.msra.mxu0 0.0
    %1277 = vmatprep.subr.mxu0 0.0
    %1278 = vmatpush1.xpose.msra.mxu0 0.0
    %1279 = vmatprep.subr.mxu0 0.0
    %1280 = vmatpush1.xpose.msra.mxu0 0.0
    %1281 = vmatprep.subr.mxu0 0.0
    %1282 = vmatpush1.xpose.msra.mxu0 0.0
    %1283 = vmatprep.subr.mxu0 0.0
    %1284 = vmatpush1.xpose.msra.mxu0 %v1251
    %1285 = vmatprep.subr.mxu0 0.0
    %1286 = vmatpush2.xpose.msra.mxu0 0.0
    %1287 = vmatprep.subr.mxu0 0.0
    %1288 = vmatpush2.xpose.msra.mxu0 0.0
    %1289 = vmatprep.subr.mxu0 0.0
    %1290 = vmatpush2.xpose.msra.mxu0 0.0
    %1291 = vmatprep.subr.mxu0 0.0
    %1292 = vmatpush2.xpose.msra.mxu0 0.0
    %1293 = vmatprep.subr.mxu0 0.0
    %1294 = vmatpush2.xpose.msra.mxu0 0.0
    %1295 = vmatprep.subr.mxu0 0.0
    %1296 = vmatpush2.xpose.msra.mxu0 0.0
    %1297 = vmatprep.subr.mxu0 0.0
    %1298 = vmatpush2.xpose.msra.mxu0 0.0
    %1299 = vmatprep.subr.mxu0 0.0
    %1300 = vmatpush2.xpose.msra.mxu0 0.0
    %1301 = vmatprep.subr.mxu0 0.0
    %1302 = vmatpush2.xpose.msra.mxu0 0.0
    %1303 = vmatprep.subr.mxu0 0.0
    %1304 = vmatpush2.xpose.msra.mxu0 0.0
    %1305 = vmatprep.subr.mxu0 0.0
    %1306 = vmatpush2.xpose.msra.mxu0 0.0
    %1307 = vmatprep.subr.mxu0 0.0
    %1308 = vmatpush2.xpose.msra.mxu0 0.0
    %1309 = vmatprep.subr.mxu0 0.0
    %1310 = vmatpush2.xpose.msra.mxu0 0.0
    %1311 = vmatprep.subr.mxu0 0.0
    %1312 = vmatpush2.xpose.msra.mxu0 0.0
    %1313 = vmatprep.subr.mxu0 0.0
    %1314 = vmatpush2.xpose.msra.mxu0 0.0
    %1315 = vmatprep.subr.mxu0 0.0
    %1316 = vmatpush2.xpose.msra.mxu0 0.0
    %1317 = vmatprep.mubr.f32.mxu0 0.0
    %1318 = vmatmul.mubr.f32.gmra.mxu0 %v1249
    %v1319 = vpop.f32.mrf.mxu0
    %v1320 = vadd.f32 %v130, %v1319
    %v1321 = vpop.f32.mrf.mxu0
    %1322 = vdwg.mxu0
    %v1323 = vsel %vm213, %v1320, -inf
    %1324 = vmax.xlane.f32.xlu0 %v1323
    %v1325 = vpop.xlane.xlu0 %1324
    %v1326 = vsub.f32 %v1320, %v1325
    %v1327 = vmul.f32 %v1326, 1.442695
    %v1328 = vpow.pop %v1327
    %v1329 = vsel %vm213, %v1328, 0.0
    %1330 = vadd.xlane.f32.xlu0 %v1329
    %v1331 = vpop.xlane.xlu0 %1330
    %v1332 = vrcp.pop %v1331
    %v1333 = vmul.f32 %v1328, %v1332
    %1334 = vrot.lane.b32.xlu0 %v1243, 64
    %v1335 = vpop.permute.xlu0 %1334
    %v1338 = vsel %vm213, %v1333, 0
    %1340 = vmatprep.subr.mxu0 0.0
    %1341 = vmatpush1.msra.mxu0 0.0
    %1342 = vmatprep.subr.mxu0 0.0
    %1343 = vmatpush1.msra.mxu0 0.0
    %1344 = vmatprep.subr.mxu0 0.0
    %1345 = vmatpush1.msra.mxu0 0.0
    %1346 = vmatprep.subr.mxu0 0.0
    %1347 = vmatpush1.msra.mxu0 0.0
    %1348 = vmatprep.subr.mxu0 0.0
    %1349 = vmatpush1.msra.mxu0 0.0
    %1350 = vmatprep.subr.mxu0 0.0
    %1351 = vmatpush1.msra.mxu0 0.0
    %1352 = vmatprep.subr.mxu0 0.0
    %1353 = vmatpush1.msra.mxu0 0.0
    %1354 = vmatprep.subr.mxu0 0.0
    %1355 = vmatpush1.msra.mxu0 0.0
    %1356 = vmatprep.subr.mxu0 0.0
    %1357 = vmatpush1.msra.mxu0 0.0
    %1358 = vmatprep.subr.mxu0 0.0
    %1359 = vmatpush1.msra.mxu0 0.0
    %1360 = vmatprep.subr.mxu0 0.0
    %1361 = vmatpush1.msra.mxu0 0.0
    %1362 = vmatprep.subr.mxu0 0.0
    %1363 = vmatpush1.msra.mxu0 0.0
    %1364 = vmatprep.subr.mxu0 0.0
    %1365 = vmatpush1.msra.mxu0 0.0
    %1366 = vmatprep.subr.mxu0 0.0
    %1367 = vmatpush1.msra.mxu0 0.0
    %1368 = vmatprep.subr.mxu0 0.0
    %1369 = vmatpush1.msra.mxu0 0.0
    %1370 = vmatprep.subr.mxu0 0.0
    %1371 = vmatpush1.msra.mxu0 %v1335
    %1372 = vmatprep.subr.mxu0 0.0
    %1373 = vmatpush2.msra.mxu0 0.0
    %1374 = vmatprep.subr.mxu0 0.0
    %1375 = vmatpush2.msra.mxu0 0.0
    %1376 = vmatprep.subr.mxu0 0.0
    %1377 = vmatpush2.msra.mxu0 0.0
    %1378 = vmatprep.subr.mxu0 0.0
    %1379 = vmatpush2.msra.mxu0 0.0
    %1380 = vmatprep.subr.mxu0 0.0
    %1381 = vmatpush2.msra.mxu0 0.0
    %1382 = vmatprep.subr.mxu0 0.0
    %1383 = vmatpush2.msra.mxu0 0.0
    %1384 = vmatprep.subr.mxu0 0.0
    %1385 = vmatpush2.msra.mxu0 0.0
    %1386 = vmatprep.subr.mxu0 0.0
    %1387 = vmatpush2.msra.mxu0 0.0
    %1388 = vmatprep.subr.mxu0 0.0
    %1389 = vmatpush2.msra.mxu0 0.0
    %1390 = vmatprep.subr.mxu0 0.0
    %1391 = vmatpush2.msra.mxu0 0.0
    %1392 = vmatprep.subr.mxu0 0.0
    %1393 = vmatpush2.msra.mxu0 0.0
    %1394 = vmatprep.subr.mxu0 0.0
    %1395 = vmatpush2.msra.mxu0 0.0
    %1396 = vmatprep.subr.mxu0 0.0
    %1397 = vmatpush2.msra.mxu0 0.0
    %1398 = vmatprep.subr.mxu0 0.0
    %1399 = vmatpush2.msra.mxu0 0.0
    %1400 = vmatprep.subr.mxu0 0.0
    %1401 = vmatpush2.msra.mxu0 0.0
    %1402 = vmatprep.subr.mxu0 0.0
    %1403 = vmatpush2.msra.mxu0 0.0
    %1404 = vmatprep.mubr.f32.mxu0 0.0
    %1405 = vmatmul.mubr.f32.gmra.mxu0 %v1338
    %v1406 = vpop.f32.mrf.mxu0
    %v1407 = vadd.f32 0.0, %v1406
    %v1408 = vpop.f32.mrf.mxu0
    %1409 = vdwg.mxu0
    %1410 = vrot.lane.b32.xlu0 %v1243, 120
    %v1411 = vpop.permute.xlu0 %1410
    %1412 = vrot.lane.b32.xlu0 %v1243, 88
    %v1413 = vpop.permute.xlu0 %1412
    %v1414 = vsel %vm213, %v1411, 0
    %v1416 = vsel %vm213, %v1413, 0
    %1418 = vmatprep.subr.mxu0 0.0
    %1419 = vmatpush1.xpose.msra.mxu0 0.0
    %1420 = vmatprep.subr.mxu0 0.0
    %1421 = vmatpush1.xpose.msra.mxu0 0.0
    %1422 = vmatprep.subr.mxu0 0.0
    %1423 = vmatpush1.xpose.msra.mxu0 0.0
    %1424 = vmatprep.subr.mxu0 0.0
    %1425 = vmatpush1.xpose.msra.mxu0 0.0
    %1426 = vmatprep.subr.mxu0 0.0
    %1427 = vmatpush1.xpose.msra.mxu0 0.0
    %1428 = vmatprep.subr.mxu0 0.0
    %1429 = vmatpush1.xpose.msra.mxu0 0.0
    %1430 = vmatprep.subr.mxu0 0.0
    %1431 = vmatpush1.xpose.msra.mxu0 0.0
    %1432 = vmatprep.subr.mxu0 0.0
    %1433 = vmatpush1.xpose.msra.mxu0 0.0
    %1434 = vmatprep.subr.mxu0 0.0
    %1435 = vmatpush1.xpose.msra.mxu0 0.0
    %1436 = vmatprep.subr.mxu0 0.0
    %1437 = vmatpush1.xpose.msra.mxu0 0.0
    %1438 = vmatprep.subr.mxu0 0.0
    %1439 = vmatpush1.xpose.msra.mxu0 0.0
    %1440 = vmatprep.subr.mxu0 0.0
    %1441 = vmatpush1.xpose.msra.mxu0 0.0
    %1442 = vmatprep.subr.mxu0 0.0
    %1443 = vmatpush1.xpose.msra.mxu0 0.0
    %1444 = vmatprep.subr.mxu0 0.0
    %1445 = vmatpush1.xpose.msra.mxu0 0.0
    %1446 = vmatprep.subr.mxu0 0.0
    %1447 = vmatpush1.xpose.msra.mxu0 0.0
    %1448 = vmatprep.subr.mxu0 0.0
    %1449 = vmatpush1.xpose.msra.mxu0 %v1416
    %1450 = vmatprep.subr.mxu0 0.0
    %1451 = vmatpush2.xpose.msra.mxu0 0.0
    %1452 = vmatprep.subr.mxu0 0.0
    %1453 = vmatpush2.xpose.msra.mxu0 0.0
    %1454 = vmatprep.subr.mxu0 0.0
    %1455 = vmatpush2.xpose.msra.mxu0 0.0
    %1456 = vmatprep.subr.mxu0 0.0
    %1457 = vmatpush2.xpose.msra.mxu0 0.0
    %1458 = vmatprep.subr.mxu0 0.0
    %1459 = vmatpush2.xpose.msra.mxu0 0.0
    %1460 = vmatprep.subr.mxu0 0.0
    %1461 = vmatpush2.xpose.msra.mxu0 0.0
    %1462 = vmatprep.subr.mxu0 0.0
    %1463 = vmatpush2.xpose.msra.mxu0 0.0
    %1464 = vmatprep.subr.mxu0 0.0
    %1465 = vmatpush2.xpose.msra.mxu0 0.0
    %1466 = vmatprep.subr.mxu0 0.0
    %1467 = vmatpush2.xpose.msra.mxu0 0.0
    %1468 = vmatprep.subr.mxu0 0.0
    %1469 = vmatpush2.xpose.msra.mxu0 0.0
    %1470 = vmatprep.subr.mxu0 0.0
    %1471 = vmatpush2.xpose.msra.mxu0 0.0
    %1472 = vmatprep.subr.mxu0 0.0
    %1473 = vmatpush2.xpose.msra.mxu0 0.0
    %1474 = vmatprep.subr.mxu0 0.0
    %1475 = vmatpush2.xpose.msra.mxu0 0.0
    %1476 = vmatprep.subr.mxu0 0.0
    %1477 = vmatpush2.xpose.msra.mxu0 0.0
    %1478 = vmatprep.subr.mxu0 0.0
    %1479 = vmatpush2.xpose.msra.mxu0 0.0
    %1480 = vmatprep.subr.mxu0 0.0
    %1481 = vmatpush2.xpose.msra.mxu0 0.0
    %1482 = vmatprep.mubr.f32.mxu0 0.0
    %1483 = vmatmul.mubr.f32.gmra.mxu0 %v1414
    %v1484 = vpop.f32.mrf.mxu0
    %v1485 = vadd.f32 %v130, %v1484
    %v1486 = vpop.f32.mrf.mxu0
    %1487 = vdwg.mxu0
    %v1488 = vsel %vm213, %v1485, -inf
    %1489 = vmax.xlane.f32.xlu0 %v1488
    %v1490 = vpop.xlane.xlu0 %1489
    %v1491 = vsub.f32 %v1485, %v1490
    %v1492 = vmul.f32 %v1491, 1.442695
    %v1493 = vpow.pop %v1492
    %v1494 = vsel %vm213, %v1493, 0.0
    %1495 = vadd.xlane.f32.xlu0 %v1494
    %v1496 = vpop.xlane.xlu0 %1495
    %v1497 = vrcp.pop %v1496
    %v1498 = vmul.f32 %v1493, %v1497
    %1499 = vrot.lane.b32.xlu0 %v1243, 56
    %v1500 = vpop.permute.xlu0 %1499
    %v1503 = vsel %vm213, %v1498, 0
    %1505 = vmatprep.subr.mxu0 0.0
    %1506 = vmatpush1.msra.mxu0 0.0
    %1507 = vmatprep.subr.mxu0 0.0
    %1508 = vmatpush1.msra.mxu0 0.0
    %1509 = vmatprep.subr.mxu0 0.0
    %1510 = vmatpush1.msra.mxu0 0.0
    %1511 = vmatprep.subr.mxu0 0.0
    %1512 = vmatpush1.msra.mxu0 0.0
    %1513 = vmatprep.subr.mxu0 0.0
    %1514 = vmatpush1.msra.mxu0 0.0
    %1515 = vmatprep.subr.mxu0 0.0
    %1516 = vmatpush1.msra.mxu0 0.0
    %1517 = vmatprep.subr.mxu0 0.0
    %1518 = vmatpush1.msra.mxu0 0.0
    %1519 = vmatprep.subr.mxu0 0.0
    %1520 = vmatpush1.msra.mxu0 0.0
    %1521 = vmatprep.subr.mxu0 0.0
    %1522 = vmatpush1.msra.mxu0 0.0
    %1523 = vmatprep.subr.mxu0 0.0
    %1524 = vmatpush1.msra.mxu0 0.0
    %1525 = vmatprep.subr.mxu0 0.0
    %1526 = vmatpush1.msra.mxu0 0.0
    %1527 = vmatprep.subr.mxu0 0.0
    %1528 = vmatpush1.msra.mxu0 0.0
    %1529 = vmatprep.subr.mxu0 0.0
    %1530 = vmatpush1.msra.mxu0 0.0
    %1531 = vmatprep.subr.mxu0 0.0
    %1532 = vmatpush1.msra.mxu0 0.0
    %1533 = vmatprep.subr.mxu0 0.0
    %1534 = vmatpush1.msra.mxu0 0.0
    %1535 = vmatprep.subr.mxu0 0.0
    %1536 = vmatpush1.msra.mxu0 %v1500
    %1537 = vmatprep.subr.mxu0 0.0
    %1538 = vmatpush2.msra.mxu0 0.0
    %1539 = vmatprep.subr.mxu0 0.0
    %1540 = vmatpush2.msra.mxu0 0.0
    %1541 = vmatprep.subr.mxu0 0.0
    %1542 = vmatpush2.msra.mxu0 0.0
    %1543 = vmatprep.subr.mxu0 0.0
    %1544 = vmatpush2.msra.mxu0 0.0
    %1545 = vmatprep.subr.mxu0 0.0
    %1546 = vmatpush2.msra.mxu0 0.0
    %1547 = vmatprep.subr.mxu0 0.0
    %1548 = vmatpush2.msra.mxu0 0.0
    %1549 = vmatprep.subr.mxu0 0.0
    %1550 = vmatpush2.msra.mxu0 0.0
    %1551 = vmatprep.subr.mxu0 0.0
    %1552 = vmatpush2.msra.mxu0 0.0
    %1553 = vmatprep.subr.mxu0 0.0
    %1554 = vmatpush2.msra.mxu0 0.0
    %1555 = vmatprep.subr.mxu0 0.0
    %1556 = vmatpush2.msra.mxu0 0.0
    %1557 = vmatprep.subr.mxu0 0.0
    %1558 = vmatpush2.msra.mxu0 0.0
    %1559 = vmatprep.subr.mxu0 0.0
    %1560 = vmatpush2.msra.mxu0 0.0
    %1561 = vmatprep.subr.mxu0 0.0
    %1562 = vmatpush2.msra.mxu0 0.0
    %1563 = vmatprep.subr.mxu0 0.0
    %1564 = vmatpush2.msra.mxu0 0.0
    %1565 = vmatprep.subr.mxu0 0.0
    %1566 = vmatpush2.msra.mxu0 0.0
    %1567 = vmatprep.subr.mxu0 0.0
    %1568 = vmatpush2.msra.mxu0 0.0
    %1569 = vmatprep.mubr.f32.mxu0 0.0
    %1570 = vmatmul.mubr.f32.gmra.mxu0 %v1503
    %v1571 = vpop.f32.mrf.mxu0
    %v1572 = vadd.f32 0.0, %v1571
    %v1573 = vpop.f32.mrf.mxu0
    %1574 = vdwg.mxu0
    %1575 = vrot.lane.b32.xlu0 %v1243, 112
    %v1576 = vpop.permute.xlu0 %1575
    %1577 = vrot.lane.b32.xlu0 %v1243, 80
    %v1578 = vpop.permute.xlu0 %1577
    %v1579 = vsel %vm213, %v1576, 0
    %v1581 = vsel %vm213, %v1578, 0
    %1583 = vmatprep.subr.mxu0 0.0
    %1584 = vmatpush1.xpose.msra.mxu0 0.0
    %1585 = vmatprep.subr.mxu0 0.0
    %1586 = vmatpush1.xpose.msra.mxu0 0.0
    %1587 = vmatprep.subr.mxu0 0.0
    %1588 = vmatpush1.xpose.msra.mxu0 0.0
    %1589 = vmatprep.subr.mxu0 0.0
    %1590 = vmatpush1.xpose.msra.mxu0 0.0
    %1591 = vmatprep.subr.mxu0 0.0
    %1592 = vmatpush1.xpose.msra.mxu0 0.0
    %1593 = vmatprep.subr.mxu0 0.0
    %1594 = vmatpush1.xpose.msra.mxu0 0.0
    %1595 = vmatprep.subr.mxu0 0.0
    %1596 = vmatpush1.xpose.msra.mxu0 0.0
    %1597 = vmatprep.subr.mxu0 0.0
    %1598 = vmatpush1.xpose.msra.mxu0 0.0
    %1599 = vmatprep.subr.mxu0 0.0
    %1600 = vmatpush1.xpose.msra.mxu0 0.0
    %1601 = vmatprep.subr.mxu0 0.0
    %1602 = vmatpush1.xpose.msra.mxu0 0.0
    %1603 = vmatprep.subr.mxu0 0.0
    %1604 = vmatpush1.xpose.msra.mxu0 0.0
    %1605 = vmatprep.subr.mxu0 0.0
    %1606 = vmatpush1.xpose.msra.mxu0 0.0
    %1607 = vmatprep.subr.mxu0 0.0
    %1608 = vmatpush1.xpose.msra.mxu0 0.0
    %1609 = vmatprep.subr.mxu0 0.0
    %1610 = vmatpush1.xpose.msra.mxu0 0.0
    %1611 = vmatprep.subr.mxu0 0.0
    %1612 = vmatpush1.xpose.msra.mxu0 0.0
    %1613 = vmatprep.subr.mxu0 0.0
    %1614 = vmatpush1.xpose.msra.mxu0 %v1581
    %1615 = vmatprep.subr.mxu0 0.0
    %1616 = vmatpush2.xpose.msra.mxu0 0.0
    %1617 = vmatprep.subr.mxu0 0.0
    %1618 = vmatpush2.xpose.msra.mxu0 0.0
    %1619 = vmatprep.subr.mxu0 0.0
    %1620 = vmatpush2.xpose.msra.mxu0 0.0
    %1621 = vmatprep.subr.mxu0 0.0
    %1622 = vmatpush2.xpose.msra.mxu0 0.0
    %1623 = vmatprep.subr.mxu0 0.0
    %1624 = vmatpush2.xpose.msra.mxu0 0.0
    %1625 = vmatprep.subr.mxu0 0.0
    %1626 = vmatpush2.xpose.msra.mxu0 0.0
    %1627 = vmatprep.subr.mxu0 0.0
    %1628 = vmatpush2.xpose.msra.mxu0 0.0
    %1629 = vmatprep.subr.mxu0 0.0
    %1630 = vmatpush2.xpose.msra.mxu0 0.0
    %1631 = vmatprep.subr.mxu0 0.0
    %1632 = vmatpush2.xpose.msra.mxu0 0.0
    %1633 = vmatprep.subr.mxu0 0.0
    %1634 = vmatpush2.xpose.msra.mxu0 0.0
    %1635 = vmatprep.subr.mxu0 0.0
    %1636 = vmatpush2.xpose.msra.mxu0 0.0
    %1637 = vmatprep.subr.mxu0 0.0
    %1638 = vmatpush2.xpose.msra.mxu0 0.0
    %1639 = vmatprep.subr.mxu0 0.0
    %1640 = vmatpush2.xpose.msra.mxu0 0.0
    %1641 = vmatprep.subr.mxu0 0.0
    %1642 = vmatpush2.xpose.msra.mxu0 0.0
    %1643 = vmatprep.subr.mxu0 0.0
    %1644 = vmatpush2.xpose.msra.mxu0 0.0
    %1645 = vmatprep.subr.mxu0 0.0
    %1646 = vmatpush2.xpose.msra.mxu0 0.0
    %1647 = vmatprep.mubr.f32.mxu0 0.0
    %1648 = vmatmul.mubr.f32.gmra.mxu0 %v1579
    %v1649 = vpop.f32.mrf.mxu0
    %v1650 = vadd.f32 %v130, %v1649
    %v1651 = vpop.f32.mrf.mxu0
    %1652 = vdwg.mxu0
    %v1653 = vsel %vm213, %v1650, -inf
    %1654 = vmax.xlane.f32.xlu0 %v1653
    %v1655 = vpop.xlane.xlu0 %1654
    %v1656 = vsub.f32 %v1650, %v1655
    %v1657 = vmul.f32 %v1656, 1.442695
    %v1658 = vpow.pop %v1657
    %v1659 = vsel %vm213, %v1658, 0.0
    %1660 = vadd.xlane.f32.xlu0 %v1659
    %v1661 = vpop.xlane.xlu0 %1660
    %v1662 = vrcp.pop %v1661
    %v1663 = vmul.f32 %v1658, %v1662
    %1664 = vrot.lane.b32.xlu0 %v1243, 48
    %v1665 = vpop.permute.xlu0 %1664
    %v1668 = vsel %vm213, %v1663, 0
    %1670 = vmatprep.subr.mxu0 0.0
    %1671 = vmatpush1.msra.mxu0 0.0
    %1672 = vmatprep.subr.mxu0 0.0
    %1673 = vmatpush1.msra.mxu0 0.0
    %1674 = vmatprep.subr.mxu0 0.0
    %1675 = vmatpush1.msra.mxu0 0.0
    %1676 = vmatprep.subr.mxu0 0.0
    %1677 = vmatpush1.msra.mxu0 0.0
    %1678 = vmatprep.subr.mxu0 0.0
    %1679 = vmatpush1.msra.mxu0 0.0
    %1680 = vmatprep.subr.mxu0 0.0
    %1681 = vmatpush1.msra.mxu0 0.0
    %1682 = vmatprep.subr.mxu0 0.0
    %1683 = vmatpush1.msra.mxu0 0.0
    %1684 = vmatprep.subr.mxu0 0.0
    %1685 = vmatpush1.msra.mxu0 0.0
    %1686 = vmatprep.subr.mxu0 0.0
    %1687 = vmatpush1.msra.mxu0 0.0
    %1688 = vmatprep.subr.mxu0 0.0
    %1689 = vmatpush1.msra.mxu0 0.0
    %1690 = vmatprep.subr.mxu0 0.0
    %1691 = vmatpush1.msra.mxu0 0.0
    %1692 = vmatprep.subr.mxu0 0.0
    %1693 = vmatpush1.msra.mxu0 0.0
    %1694 = vmatprep.subr.mxu0 0.0
    %1695 = vmatpush1.msra.mxu0 0.0
    %1696 = vmatprep.subr.mxu0 0.0
    %1697 = vmatpush1.msra.mxu0 0.0
    %1698 = vmatprep.subr.mxu0 0.0
    %1699 = vmatpush1.msra.mxu0 0.0
    %1700 = vmatprep.subr.mxu0 0.0
    %1701 = vmatpush1.msra.mxu0 %v1665
    %1702 = vmatprep.subr.mxu0 0.0
    %1703 = vmatpush2.msra.mxu0 0.0
    %1704 = vmatprep.subr.mxu0 0.0
    %1705 = vmatpush2.msra.mxu0 0.0
    %1706 = vmatprep.subr.mxu0 0.0
    %1707 = vmatpush2.msra.mxu0 0.0
    %1708 = vmatprep.subr.mxu0 0.0
    %1709 = vmatpush2.msra.mxu0 0.0
    %1710 = vmatprep.subr.mxu0 0.0
    %1711 = vmatpush2.msra.mxu0 0.0
    %1712 = vmatprep.subr.mxu0 0.0
    %1713 = vmatpush2.msra.mxu0 0.0
    %1714 = vmatprep.subr.mxu0 0.0
    %1715 = vmatpush2.msra.mxu0 0.0
    %1716 = vmatprep.subr.mxu0 0.0
    %1717 = vmatpush2.msra.mxu0 0.0
    %1718 = vmatprep.subr.mxu0 0.0
    %1719 = vmatpush2.msra.mxu0 0.0
    %1720 = vmatprep.subr.mxu0 0.0
    %1721 = vmatpush2.msra.mxu0 0.0
    %1722 = vmatprep.subr.mxu0 0.0
    %1723 = vmatpush2.msra.mxu0 0.0
    %1724 = vmatprep.subr.mxu0 0.0
    %1725 = vmatpush2.msra.mxu0 0.0
    %1726 = vmatprep.subr.mxu0 0.0
    %1727 = vmatpush2.msra.mxu0 0.0
    %1728 = vmatprep.subr.mxu0 0.0
    %1729 = vmatpush2.msra.mxu0 0.0
    %1730 = vmatprep.subr.mxu0 0.0
    %1731 = vmatpush2.msra.mxu0 0.0
    %1732 = vmatprep.subr.mxu0 0.0
    %1733 = vmatpush2.msra.mxu0 0.0
    %1734 = vmatprep.mubr.f32.mxu0 0.0
    %1735 = vmatmul.mubr.f32.gmra.mxu0 %v1668
    %v1736 = vpop.f32.mrf.mxu0
    %v1737 = vadd.f32 0.0, %v1736
    %v1738 = vpop.f32.mrf.mxu0
    %1739 = vdwg.mxu0
    %1740 = vrot.lane.b32.xlu0 %v1243, 104
    %v1741 = vpop.permute.xlu0 %1740
    %1742 = vrot.lane.b32.xlu0 %v1243, 72
    %v1743 = vpop.permute.xlu0 %1742
    %v1744 = vsel %vm213, %v1741, 0
    %v1746 = vsel %vm213, %v1743, 0
    %1748 = vmatprep.subr.mxu0 0.0
    %1749 = vmatpush1.xpose.msra.mxu0 0.0
    %1750 = vmatprep.subr.mxu0 0.0
    %1751 = vmatpush1.xpose.msra.mxu0 0.0
    %1752 = vmatprep.subr.mxu0 0.0
    %1753 = vmatpush1.xpose.msra.mxu0 0.0
    %1754 = vmatprep.subr.mxu0 0.0
    %1755 = vmatpush1.xpose.msra.mxu0 0.0
    %1756 = vmatprep.subr.mxu0 0.0
    %1757 = vmatpush1.xpose.msra.mxu0 0.0
    %1758 = vmatprep.subr.mxu0 0.0
    %1759 = vmatpush1.xpose.msra.mxu0 0.0
    %1760 = vmatprep.subr.mxu0 0.0
    %1761 = vmatpush1.xpose.msra.mxu0 0.0
    %1762 = vmatprep.subr.mxu0 0.0
    %1763 = vmatpush1.xpose.msra.mxu0 0.0
    %1764 = vmatprep.subr.mxu0 0.0
    %1765 = vmatpush1.xpose.msra.mxu0 0.0
    %1766 = vmatprep.subr.mxu0 0.0
    %1767 = vmatpush1.xpose.msra.mxu0 0.0
    %1768 = vmatprep.subr.mxu0 0.0
    %1769 = vmatpush1.xpose.msra.mxu0 0.0
    %1770 = vmatprep.subr.mxu0 0.0
    %1771 = vmatpush1.xpose.msra.mxu0 0.0
    %1772 = vmatprep.subr.mxu0 0.0
    %1773 = vmatpush1.xpose.msra.mxu0 0.0
    %1774 = vmatprep.subr.mxu0 0.0
    %1775 = vmatpush1.xpose.msra.mxu0 0.0
    %1776 = vmatprep.subr.mxu0 0.0
    %1777 = vmatpush1.xpose.msra.mxu0 0.0
    %1778 = vmatprep.subr.mxu0 0.0
    %1779 = vmatpush1.xpose.msra.mxu0 %v1746
    %1780 = vmatprep.subr.mxu0 0.0
    %1781 = vmatpush2.xpose.msra.mxu0 0.0
    %1782 = vmatprep.subr.mxu0 0.0
    %1783 = vmatpush2.xpose.msra.mxu0 0.0
    %1784 = vmatprep.subr.mxu0 0.0
    %1785 = vmatpush2.xpose.msra.mxu0 0.0
    %1786 = vmatprep.subr.mxu0 0.0
    %1787 = vmatpush2.xpose.msra.mxu0 0.0
    %1788 = vmatprep.subr.mxu0 0.0
    %1789 = vmatpush2.xpose.msra.mxu0 0.0
    %1790 = vmatprep.subr.mxu0 0.0
    %1791 = vmatpush2.xpose.msra.mxu0 0.0
    %1792 = vmatprep.subr.mxu0 0.0
    %1793 = vmatpush2.xpose.msra.mxu0 0.0
    %1794 = vmatprep.subr.mxu0 0.0
    %1795 = vmatpush2.xpose.msra.mxu0 0.0
    %1796 = vmatprep.subr.mxu0 0.0
    %1797 = vmatpush2.xpose.msra.mxu0 0.0
    %1798 = vmatprep.subr.mxu0 0.0
    %1799 = vmatpush2.xpose.msra.mxu0 0.0
    %1800 = vmatprep.subr.mxu0 0.0
    %1801 = vmatpush2.xpose.msra.mxu0 0.0
    %1802 = vmatprep.subr.mxu0 0.0
    %1803 = vmatpush2.xpose.msra.mxu0 0.0
    %1804 = vmatprep.subr.mxu0 0.0
    %1805 = vmatpush2.xpose.msra.mxu0 0.0
    %1806 = vmatprep.subr.mxu0 0.0
    %1807 = vmatpush2.xpose.msra.mxu0 0.0
    %1808 = vmatprep.subr.mxu0 0.0
    %1809 = vmatpush2.xpose.msra.mxu0 0.0
    %1810 = vmatprep.subr.mxu0 0.0
    %1811 = vmatpush2.xpose.msra.mxu0 0.0
    %1812 = vmatprep.mubr.f32.mxu0 0.0
    %1813 = vmatmul.mubr.f32.gmra.mxu0 %v1744
    %v1814 = vpop.f32.mrf.mxu0
    %v1815 = vadd.f32 %v130, %v1814
    %v1816 = vpop.f32.mrf.mxu0
    %1817 = vdwg.mxu0
    %v1818 = vsel %vm213, %v1815, -inf
    %1819 = vmax.xlane.f32.xlu0 %v1818
    %v1820 = vpop.xlane.xlu0 %1819
    %v1821 = vsub.f32 %v1815, %v1820
    %v1822 = vmul.f32 %v1821, 1.442695
    %v1823 = vpow.pop %v1822
    %v1824 = vsel %vm213, %v1823, 0.0
    %1825 = vadd.xlane.f32.xlu0 %v1824
    %v1826 = vpop.xlane.xlu0 %1825
    %v1827 = vrcp.pop %v1826
    %v1828 = vmul.f32 %v1823, %v1827
    %1829 = vrot.lane.b32.xlu0 %v1243, 40
    %v1830 = vpop.permute.xlu0 %1829
    %v1833 = vsel %vm213, %v1828, 0
    %1835 = vmatprep.subr.mxu0 0.0
    %1836 = vmatpush1.msra.mxu0 0.0
    %1837 = vmatprep.subr.mxu0 0.0
    %1838 = vmatpush1.msra.mxu0 0.0
    %1839 = vmatprep.subr.mxu0 0.0
    %1840 = vmatpush1.msra.mxu0 0.0
    %1841 = vmatprep.subr.mxu0 0.0
    %1842 = vmatpush1.msra.mxu0 0.0
    %1843 = vmatprep.subr.mxu0 0.0
    %1844 = vmatpush1.msra.mxu0 0.0
    %1845 = vmatprep.subr.mxu0 0.0
    %1846 = vmatpush1.msra.mxu0 0.0
    %1847 = vmatprep.subr.mxu0 0.0
    %1848 = vmatpush1.msra.mxu0 0.0
    %1849 = vmatprep.subr.mxu0 0.0
    %1850 = vmatpush1.msra.mxu0 0.0
    %1851 = vmatprep.subr.mxu0 0.0
    %1852 = vmatpush1.msra.mxu0 0.0
    %1853 = vmatprep.subr.mxu0 0.0
    %1854 = vmatpush1.msra.mxu0 0.0
    %1855 = vmatprep.subr.mxu0 0.0
    %1856 = vmatpush1.msra.mxu0 0.0
    %1857 = vmatprep.subr.mxu0 0.0
    %1858 = vmatpush1.msra.mxu0 0.0
    %1859 = vmatprep.subr.mxu0 0.0
    %1860 = vmatpush1.msra.mxu0 0.0
    %1861 = vmatprep.subr.mxu0 0.0
    %1862 = vmatpush1.msra.mxu0 0.0
    %1863 = vmatprep.subr.mxu0 0.0
    %1864 = vmatpush1.msra.mxu0 0.0
    %1865 = vmatprep.subr.mxu0 0.0
    %1866 = vmatpush1.msra.mxu0 %v1830
    %1867 = vmatprep.subr.mxu0 0.0
    %1868 = vmatpush2.msra.mxu0 0.0
    %1869 = vmatprep.subr.mxu0 0.0
    %1870 = vmatpush2.msra.mxu0 0.0
    %1871 = vmatprep.subr.mxu0 0.0
    %1872 = vmatpush2.msra.mxu0 0.0
    %1873 = vmatprep.subr.mxu0 0.0
    %1874 = vmatpush2.msra.mxu0 0.0
    %1875 = vmatprep.subr.mxu0 0.0
    %1876 = vmatpush2.msra.mxu0 0.0
    %1877 = vmatprep.subr.mxu0 0.0
    %1878 = vmatpush2.msra.mxu0 0.0
    %1879 = vmatprep.subr.mxu0 0.0
    %1880 = vmatpush2.msra.mxu0 0.0
    %1881 = vmatprep.subr.mxu0 0.0
    %1882 = vmatpush2.msra.mxu0 0.0
    %1883 = vmatprep.subr.mxu0 0.0
    %1884 = vmatpush2.msra.mxu0 0.0
    %1885 = vmatprep.subr.mxu0 0.0
    %1886 = vmatpush2.msra.mxu0 0.0
    %1887 = vmatprep.subr.mxu0 0.0
    %1888 = vmatpush2.msra.mxu0 0.0
    %1889 = vmatprep.subr.mxu0 0.0
    %1890 = vmatpush2.msra.mxu0 0.0
    %1891 = vmatprep.subr.mxu0 0.0
    %1892 = vmatpush2.msra.mxu0 0.0
    %1893 = vmatprep.subr.mxu0 0.0
    %1894 = vmatpush2.msra.mxu0 0.0
    %1895 = vmatprep.subr.mxu0 0.0
    %1896 = vmatpush2.msra.mxu0 0.0
    %1897 = vmatprep.subr.mxu0 0.0
    %1898 = vmatpush2.msra.mxu0 0.0
    %1899 = vmatprep.mubr.f32.mxu0 0.0
    %1900 = vmatmul.mubr.f32.gmra.mxu0 %v1833
    %v1901 = vpop.f32.mrf.mxu0
    %v1902 = vadd.f32 0.0, %v1901
    %v1903 = vpop.f32.mrf.mxu0
    %1904 = vdwg.mxu0
    %1906 = vrot.lane.b32.xlu0 %v1572, 8
    %v1907 = vpop.permute.xlu0 %1906
    %1910 = vrot.lane.b32.xlu0 %v1737, 16
    %v1911 = vpop.permute.xlu0 %1910
    %1914 = vrot.lane.b32.xlu0 %v1902, 24
    %v1915 = vpop.permute.xlu0 %1914
    %v1917 = vsel %vm213, %v1407, %v1907
    %v1918 = vsel %vm883, %v1917, %v1911
    %v1919 = vsel %vm885, %v1918, %v1915
    %v1920 = vld [vmem:[%s1 + $0x1d8] sm:$0xff]
    %v1921 = vld [vmem:[%s1 + $0x1e0] sm:$0xff]
    %v1922 = vld [vmem:[%s1 + $0x1e8] sm:$0xff]
    %v1923 = vld [vmem:[%s1 + $0x1f0] sm:$0xff]
    %v1924 = vld [vmem:[%s1 + $0x278] sm:$0xff]
    %v1926 = vsel %vm136, %v1919, 0
    %1928 = vmatprep.subr.mxu0 0.0
    %1929 = vmatpush1.msra.mxu0 0.0
    %1930 = vmatprep.subr.mxu0 0.0
    %1931 = vmatpush1.msra.mxu0 0.0
    %1932 = vmatprep.subr.mxu0 0.0
    %1933 = vmatpush1.msra.mxu0 0.0
    %1934 = vmatprep.subr.mxu0 0.0
    %1935 = vmatpush1.msra.mxu0 0.0
    %1936 = vmatprep.subr.mxu0 0.0
    %1937 = vmatpush1.msra.mxu0 0.0
    %1938 = vmatprep.subr.mxu0 0.0
    %1939 = vmatpush1.msra.mxu0 0.0
    %1940 = vmatprep.subr.mxu0 0.0
    %1941 = vmatpush1.msra.mxu0 0.0
    %1942 = vmatprep.subr.mxu0 0.0
    %1943 = vmatpush1.msra.mxu0 0.0
    %1944 = vmatprep.subr.mxu0 0.0
    %1945 = vmatpush1.msra.mxu0 0.0
    %1946 = vmatprep.subr.mxu0 0.0
    %1947 = vmatpush1.msra.mxu0 0.0
    %1948 = vmatprep.subr.mxu0 0.0
    %1949 = vmatpush1.msra.mxu0 0.0
    %1950 = vmatprep.subr.mxu0 0.0
    %1951 = vmatpush1.msra.mxu0 0.0
    %1952 = vmatprep.subr.mxu0 0.0
    %1953 = vmatpush1.msra.mxu0 %v1923
    %1954 = vmatprep.subr.mxu0 0.0
    %1955 = vmatpush1.msra.mxu0 %v1922
    %1956 = vmatprep.subr.mxu0 0.0
    %1957 = vmatpush1.msra.mxu0 %v1921
    %1958 = vmatprep.subr.mxu0 0.0
    %1959 = vmatpush1.msra.mxu0 %v1920
    %1960 = vmatprep.subr.mxu0 0.0
    %1961 = vmatpush2.msra.mxu0 0.0
    %1962 = vmatprep.subr.mxu0 0.0
    %1963 = vmatpush2.msra.mxu0 0.0
    %1964 = vmatprep.subr.mxu0 0.0
    %1965 = vmatpush2.msra.mxu0 0.0
    %1966 = vmatprep.subr.mxu0 0.0
    %1967 = vmatpush2.msra.mxu0 0.0
    %1968 = vmatprep.subr.mxu0 0.0
    %1969 = vmatpush2.msra.mxu0 0.0
    %1970 = vmatprep.subr.mxu0 0.0
    %1971 = vmatpush2.msra.mxu0 0.0
    %1972 = vmatprep.subr.mxu0 0.0
    %1973 = vmatpush2.msra.mxu0 0.0
    %1974 = vmatprep.subr.mxu0 0.0
    %1975 = vmatpush2.msra.mxu0 0.0
    %1976 = vmatprep.subr.mxu0 0.0
    %1977 = vmatpush2.msra.mxu0 0.0
    %1978 = vmatprep.subr.mxu0 0.0
    %1979 = vmatpush2.msra.mxu0 0.0
    %1980 = vmatprep.subr.mxu0 0.0
    %1981 = vmatpush2.msra.mxu0 0.0
    %1982 = vmatprep.subr.mxu0 0.0
    %1983 = vmatpush2.msra.mxu0 0.0
    %1984 = vmatprep.subr.mxu0 0.0
    %1985 = vmatpush2.msra.mxu0 0.0
    %1986 = vmatprep.subr.mxu0 0.0
    %1987 = vmatpush2.msra.mxu0 0.0
    %1988 = vmatprep.subr.mxu0 0.0
    %1989 = vmatpush2.msra.mxu0 0.0
    %1990 = vmatprep.subr.mxu0 0.0
    %1991 = vmatpush2.msra.mxu0 0.0
    %1992 = vmatprep.mubr.f32.mxu0 0.0
    %1993 = vmatmul.mubr.f32.gmra.mxu0 %v1926
    %v1994 = vpop.f32.mrf.mxu0
    %v1995 = vadd.f32 %v1924, %v1994
    %v1996 = vpop.f32.mrf.mxu0
    %1997 = vdwg.mxu0
    %v1998 = vld [vmem:[%s1 + $0x280] sm:$0xff]
    %v1999 = vld [vmem:[%s1 + $0x288] sm:$0xff]
    %v2000 = vadd.f32 %v1167, %v1995
    %v2001 = vsel %vm136, %v2000, 0.0
    %2002 = vadd.xlane.f32.xlu0 %v2001
    %v2003 = vpop.xlane.xlu0 %2002
    %v2004 = vmul.f32 %v2003, %v971
    %v2005 = vsub.f32 %v2000, %v2004
    %v2006 = vmul.f32 %v2005, %v2005
    %v2007 = vsel %vm136, %v2006, 0.0
    %2008 = vadd.xlane.f32.xlu0 %v2007
    %v2009 = vpop.xlane.xlu0 %2008
    %v2010 = vmul.f32 %v2009, %v971
    %v2011 = vadd.f32 %v2010, 1e-05
    %v2012 = vrsqrt.pop %v2011
    %v2013 = vmul.f32 %v2005, %v2012
    %v2014 = vmul.f32 %v2013, %v1998
    %v2015 = vadd.f32 %v2014, %v1999
    %v2016 = vld [vmem:[%s3 + $0x28] sm:$0xff]
    %v2017 = vld [vmem:[%s3 + $0x30] sm:$0xff]
    %v2018 = vld [vmem:[%s3 + $0x38] sm:$0xff]
    %v2019 = vld [vmem:[%s3 + $0x40] sm:$0xff]
    %v2020 = vld [vmem:[%s3 + $0x48] sm:$0xff]
    %v2021 = vld [vmem:[%s1 + $0x1f8] sm:$0xff]
    %v2022 = vld [vmem:[%s1 + $0x200] sm:$0xff]
    %v2023 = vld [vmem:[%s1 + $0x208] sm:$0xff]
    %v2024 = vld [vmem:[%s1 + $0x210] sm:$0xff]
    %v2025 = vld [vmem:[%s1 + $0x218] sm:$0xff]
    %v2026 = vld [vmem:[%s1 + $0x220] sm:$0xff]
    %v2027 = vld [vmem:[%s1 + $0x228] sm:$0xff]
    %v2028 = vld [vmem:[%s1 + $0x230] sm:$0xff]
    %v2029 = vld [vmem:[%s1 + $0x238] sm:$0xff]
    %v2030 = vld [vmem:[%s1 + $0x240] sm:$0xff]
    %v2031 = vld [vmem:[%s1 + $0x248] sm:$0xff]
    %v2032 = vld [vmem:[%s1 + $0x250] sm:$0xff]
    %v2033 = vld [vmem:[%s1 + $0x258] sm:$0xff]
    %v2034 = vld [vmem:[%s1 + $0x260] sm:$0xff]
    %v2035 = vld [vmem:[%s1 + $0x268] sm:$0xff]
    %v2036 = vld [vmem:[%s1 + $0x270] sm:$0xff]
    %v2037 = vld [vmem:[%s1 + $0x2a0] sm:$0xff]
    %v2039 = vsel %vm136, %v2015, 0
    %2041 = vmatprep.subr.mxu0 0.0
    %2042 = vmatpush1.msra.mxu0 0.0
    %2043 = vmatprep.subr.mxu0 0.0
    %2044 = vmatpush1.msra.mxu0 0.0
    %2045 = vmatprep.subr.mxu0 0.0
    %2046 = vmatpush1.msra.mxu0 0.0
    %2047 = vmatprep.subr.mxu0 0.0
    %2048 = vmatpush1.msra.mxu0 0.0
    %2049 = vmatprep.subr.mxu0 0.0
    %2050 = vmatpush1.msra.mxu0 0.0
    %2051 = vmatprep.subr.mxu0 0.0
    %2052 = vmatpush1.msra.mxu0 0.0
    %2053 = vmatprep.subr.mxu0 0.0
    %2054 = vmatpush1.msra.mxu0 0.0
    %2055 = vmatprep.subr.mxu0 0.0
    %2056 = vmatpush1.msra.mxu0 0.0
    %2057 = vmatprep.subr.mxu0 0.0
    %2058 = vmatpush1.msra.mxu0 0.0
    %2059 = vmatprep.subr.mxu0 0.0
    %2060 = vmatpush1.msra.mxu0 0.0
    %2061 = vmatprep.subr.mxu0 0.0
    %2062 = vmatpush1.msra.mxu0 0.0
    %2063 = vmatprep.subr.mxu0 0.0
    %2064 = vmatpush1.msra.mxu0 0.0
    %2065 = vmatprep.subr.mxu0 0.0
    %2066 = vmatpush1.msra.mxu0 %v2019
    %2067 = vmatprep.subr.mxu0 0.0
    %2068 = vmatpush1.msra.mxu0 %v2018
    %2069 = vmatprep.subr.mxu0 0.0
    %2070 = vmatpush1.msra.mxu0 %v2017
    %2071 = vmatprep.subr.mxu0 0.0
    %2072 = vmatpush1.msra.mxu0 %v2016
    %2073 = vmatprep.subr.mxu0 0.0
    %2074 = vmatpush2.msra.mxu0 0.0
    %2075 = vmatprep.subr.mxu0 0.0
    %2076 = vmatpush2.msra.mxu0 0.0
    %2077 = vmatprep.subr.mxu0 0.0
    %2078 = vmatpush2.msra.mxu0 0.0
    %2079 = vmatprep.subr.mxu0 0.0
    %2080 = vmatpush2.msra.mxu0 0.0
    %2081 = vmatprep.subr.mxu0 0.0
    %2082 = vmatpush2.msra.mxu0 0.0
    %2083 = vmatprep.subr.mxu0 0.0
    %2084 = vmatpush2.msra.mxu0 0.0
    %2085 = vmatprep.subr.mxu0 0.0
    %2086 = vmatpush2.msra.mxu0 0.0
    %2087 = vmatprep.subr.mxu0 0.0
    %2088 = vmatpush2.msra.mxu0 0.0
    %2089 = vmatprep.subr.mxu0 0.0
    %2090 = vmatpush2.msra.mxu0 0.0
    %2091 = vmatprep.subr.mxu0 0.0
    %2092 = vmatpush2.msra.mxu0 0.0
    %2093 = vmatprep.subr.mxu0 0.0
    %2094 = vmatpush2.msra.mxu0 0.0
    %2095 = vmatprep.subr.mxu0 0.0
    %2096 = vmatpush2.msra.mxu0 0.0
    %2097 = vmatprep.subr.mxu0 0.0
    %2098 = vmatpush2.msra.mxu0 0.0
    %2099 = vmatprep.subr.mxu0 0.0
    %2100 = vmatpush2.msra.mxu0 0.0
    %2101 = vmatprep.subr.mxu0 0.0
    %2102 = vmatpush2.msra.mxu0 0.0
    %2103 = vmatprep.subr.mxu0 0.0
    %2104 = vmatpush2.msra.mxu0 0.0
    %2105 = vmatprep.mubr.f32.mxu0 0.0
    %2106 = vmatmul.mubr.f32.gmra.mxu0 %v2039
    %v2107 = vpop.f32.mrf.mxu0
    %v2108 = vadd.f32 %v2020, %v2107
    %v2109 = vpop.f32.mrf.mxu0
    %2110 = vdwg.mxu0
    %v2111 = vmax.f32 %v2108, 0.0
    %2112 = vmatprep.subr.mxu0 0.0
    %2113 = vmatpush1.msra.mxu0 %v2036
    %2114 = vmatprep.subr.mxu0 0.0
    %2115 = vmatpush1.msra.mxu0 %v2035
    %2116 = vmatprep.subr.mxu0 0.0
    %2117 = vmatpush1.msra.mxu0 %v2034
    %2118 = vmatprep.subr.mxu0 0.0
    %2119 = vmatpush1.msra.mxu0 %v2033
    %2120 = vmatprep.subr.mxu0 0.0
    %2121 = vmatpush1.msra.mxu0 %v2032
    %2122 = vmatprep.subr.mxu0 0.0
    %2123 = vmatpush1.msra.mxu0 %v2031
    %2124 = vmatprep.subr.mxu0 0.0
    %2125 = vmatpush1.msra.mxu0 %v2030
    %2126 = vmatprep.subr.mxu0 0.0
    %2127 = vmatpush1.msra.mxu0 %v2029
    %2128 = vmatprep.subr.mxu0 0.0
    %2129 = vmatpush1.msra.mxu0 %v2028
    %2130 = vmatprep.subr.mxu0 0.0
    %2131 = vmatpush1.msra.mxu0 %v2027
    %2132 = vmatprep.subr.mxu0 0.0
    %2133 = vmatpush1.msra.mxu0 %v2026
    %2134 = vmatprep.subr.mxu0 0.0
    %2135 = vmatpush1.msra.mxu0 %v2025
    %2136 = vmatprep.subr.mxu0 0.0
    %2137 = vmatpush1.msra.mxu0 %v2024
    %2138 = vmatprep.subr.mxu0 0.0
    %2139 = vmatpush1.msra.mxu0 %v2023
    %2140 = vmatprep.subr.mxu0 0.0
    %2141 = vmatpush1.msra.mxu0 %v2022
    %2142 = vmatprep.subr.mxu0 0.0
    %2143 = vmatpush1.msra.mxu0 %v2021
    %2144 = vmatprep.subr.mxu0 0.0
    %2145 = vmatpush2.msra.mxu0 0.0
    %2146 = vmatprep.subr.mxu0 0.0
    %2147 = vmatpush2.msra.mxu0 0.0
    %2148 = vmatprep.subr.mxu0 0.0
    %2149 = vmatpush2.msra.mxu0 0.0
    %2150 = vmatprep.subr.mxu0 0.0
    %2151 = vmatpush2.msra.mxu0 0.0
    %2152 = vmatprep.subr.mxu0 0.0
    %2153 = vmatpush2.msra.mxu0 0.0
    %2154 = vmatprep.subr.mxu0 0.0
    %2155 = vmatpush2.msra.mxu0 0.0
    %2156 = vmatprep.subr.mxu0 0.0
    %2157 = vmatpush2.msra.mxu0 0.0
    %2158 = vmatprep.subr.mxu0 0.0
    %2159 = vmatpush2.msra.mxu0 0.0
    %2160 = vmatprep.subr.mxu0 0.0
    %2161 = vmatpush2.msra.mxu0 0.0
    %2162 = vmatprep.subr.mxu0 0.0
    %2163 = vmatpush2.msra.mxu0 0.0
    %2164 = vmatprep.subr.mxu0 0.0
    %2165 = vmatpush2.msra.mxu0 0.0
    %2166 = vmatprep.subr.mxu0 0.0
    %2167 = vmatpush2.msra.mxu0 0.0
    %2168 = vmatprep.subr.mxu0 0.0
    %2169 = vmatpush2.msra.mxu0 0.0
    %2170 = vmatprep.subr.mxu0 0.0
    %2171 = vmatpush2.msra.mxu0 0.0
    %2172 = vmatprep.subr.mxu0 0.0
    %2173 = vmatpush2.msra.mxu0 0.0
    %2174 = vmatprep.subr.mxu0 0.0
    %2175 = vmatpush2.msra.mxu0 0.0
    %2176 = vmatprep.mubr.f32.mxu0 0.0
    %2177 = vmatmul.mubr.f32.gmra.mxu0 %v2111
    %v2178 = vpop.f32.mrf.mxu0
    %v2179 = vadd.f32 %v2037, %v2178
    %v2180 = vpop.f32.mrf.mxu0
    %2181 = vdwg.mxu0
    %v2182 = vld [vmem:[%s1 + $0x290] sm:$0xff]
    %v2183 = vld [vmem:[%s1 + $0x298] sm:$0xff]
    %v2184 = vadd.f32 %v2015, %v2179
    %v2185 = vsel %vm136, %v2184, 0.0
    %2186 = vadd.xlane.f32.xlu0 %v2185
    %v2187 = vpop.xlane.xlu0 %2186
    %v2188 = vmul.f32 %v2187, %v971
    %v2189 = vsub.f32 %v2184, %v2188
    %v2190 = vmul.f32 %v2189, %v2189
    %v2191 = vsel %vm136, %v2190, 0.0
    %2192 = vadd.xlane.f32.xlu0 %v2191
    %v2193 = vpop.xlane.xlu0 %2192
    %v2194 = vmul.f32 %v2193, %v971
    %v2195 = vadd.f32 %v2194, 1e-05
    %v2196 = vrsqrt.pop %v2195
    %v2197 = vmul.f32 %v2189, %v2196
    %v2198 = vmul.f32 %v2197, %v2182
    %v2199 = vadd.f32 %v2198, %v2183
    %2200 = vst.msk [vmem:[#allocation2] sm:$0xff] %vm136, %v2199
    // Predicated region
    $region18: #{tpu_custom_call.1} parent=1 // pred_check
      _
    $region19: #{tpu_custom_call.1} parent=1 // pred_check_branch
      %2202 = sbr.rel (0) target = $region21
    $region20: #{tpu_custom_call.1} parent=1 // pred_region
      %s2204 = ssub.s32 128, 128
      %2205 = vsyncadd [#allocation3], %s2204
      %s2207 = sshll.u32 [#allocation2], 4
      %s2208 = int_to_ptr.vmem [resolvable:$true] %s2207
      %2210 = dma.vmem_to_hbm [thread:$0]  %s2208, 128, %s4, [#allocation3]
    $region21: #{tpu_custom_call.1} parent=1 // pred_fallthru
      _
    // Predicated region
    $region22: #{tpu_custom_call.1} parent=1 // pred_check
      _
    $region23: #{tpu_custom_call.1} parent=1 // pred_check_branch
      %2212 = sbr.rel (0) target = $region25
    $region24: #{tpu_custom_call.1} parent=1 // pred_region
      %2213 = dma.done [#allocation3], 128
    $region25: #{tpu_custom_call.1} parent=1 // pred_fallthru
      _
    %2214 = vsyncpa [#allocation3], 1

</llo_original>
